<compile_context>
chip_gen: v5e
topology: v5e:2x2
jax: 0.10.0
libtpu: 0.0.40
codegen_flags: <defaults>
</compile_context>

<pallas_src>
import math
import functools
from functools import lru_cache

import numpy as np
import jax
import jax.numpy as jnp
from jax.experimental import pallas as pl
from jax.experimental.pallas import tpu as pltpu


@lru_cache(maxsize=8)
def _dft_matrices(a: int, b: int):
    """Stacked real factors of ortho rfft2 / irfft2 over an (a, b) grid.

    Returns float32 numpy arrays:
      KF : (2F, S)  with  [Xr; Xi] = KF @ x_flat        (rfft2, norm='ortho')
      IG : (S, 2F)  with  y = IG @ [Yr; Yi]             (irfft2, norm='ortho')
    where S = a*b, F = a*(b//2+1), spatial index s = m*b + n,
    frequency index f = ka*w + kb.
    """
    w = b // 2 + 1
    ka = np.arange(a); m = np.arange(a)
    kb = np.arange(w); n = np.arange(b)

    # forward: rfft2, norm='ortho'  (negative exponent, 1/sqrt(a*b) total)
    fa = np.exp(-2j * np.pi * np.outer(ka, m) / a) / math.sqrt(a)          # (a, a)
    fb = np.exp(-2j * np.pi * np.outer(kb, n) / b) / math.sqrt(b)          # (w, b)
    kfwd = np.einsum("km,ln->klmn", fa, fb).reshape(a * w, a * b)          # (F, S)

    # inverse: irfft2(s=(a,b), norm='ortho') == complex ifft along axis 0 then
    # C2R irfft along axis 1: interior bins doubled, imag part of DC / Nyquist
    # dropped (taking the real part of the sum).
    ai = np.exp(+2j * np.pi * np.outer(m, ka) / a) / math.sqrt(a)          # (a, a)
    cvec = np.full(w, 2.0)
    cvec[0] = 1.0
    if b % 2 == 0:
        cvec[b // 2] = 1.0
    bi = cvec[None, :] * np.exp(+2j * np.pi * np.outer(n, kb) / b) / math.sqrt(b)
    kinv = np.einsum("mk,nl->mnkl", ai, bi).reshape(a * b, a * w)          # (S, F)

    # y = Re(kinv) @ Yr - Im(kinv) @ Yi  ->  the right half of IG carries -Im.
    kf = np.concatenate([kfwd.real, kfwd.imag], axis=0).astype(np.float32)   # (2F, S)
    ig = np.concatenate([kinv.real, -kinv.imag], axis=1).astype(np.float32)  # (S, 2F)
    return kf, ig


def _global_filter_kernel(x_ref, kf_ref, wr_ref, wi_ref, ig_ref, o_ref, yy_ref,
                          *, nfreq, nb):
    # x_ref : (nb, S, tc) f32    kf_ref: (2F, S) bf16    ig_ref: (S, 2F) bf16
    # wr/wi : (F, tc)  f32       o_ref : (nb, S, tc) f32
    # yy_ref: (2F, tc) bf16 VMEM scratch holding [Yr; Yi]
    kf = kf_ref[...]
    ig = ig_ref[...]
    wr = wr_ref[...]          # hoisted out of the unrolled loop
    wi = wi_ref[...]
    for i in range(nb):       # static unroll over the batch rows of this block
        x = x_ref[i].astype(jnp.bfloat16)                                  # (S, tc)
        # rfft2: one fused MXU pass producing [Xr; Xi], f32 accumulation.
        xf = jnp.dot(kf, x, preferred_element_type=jnp.float32)            # (2F, tc)
        xr = xf[:nfreq]
        xi = xf[nfreq:]
        # complex filter multiply in f32; real/imag halves written straight
        # into the (2F, tc) scratch (no concat copy).
        yy_ref[pl.ds(0, nfreq), :] = (xr * wr - xi * wi).astype(jnp.bfloat16)
        yy_ref[pl.ds(nfreq, nfreq), :] = (xr * wi + xi * wr).astype(jnp.bfloat16)
        # irfft2: one fused MXU pass with K = 2F.
        y = jnp.dot(ig, yy_ref[...], preferred_element_type=jnp.float32)   # (S, tc)
        o_ref[i] = y.astype(o_ref.dtype)


def global_filter_forward(x, complex_weight, *, spatial_size=None):
    """x: (B, N, C); complex_weight: (h, w, C, 2).  Returns (B, N, C) float32."""
    B, N, C = x.shape
    if spatial_size is None:
        a = b = int(math.sqrt(N))
    else:
        a, b = spatial_size
    h, w, dim, two = complex_weight.shape
    assert a * b == N and h == a and w == b // 2 + 1 and dim == C and two == 2

    S = a * b          # spatial positions (= N)
    F = h * w          # rfft2 frequency bins

    kf_np, ig_np = _dft_matrices(a, b)
    # bf16 MXU operands (f32 accumulation in-kernel): ~3-6x matmul throughput.
    kf = jnp.asarray(kf_np).astype(jnp.bfloat16)        # (2F, S)
    ig = jnp.asarray(ig_np).astype(jnp.bfloat16)        # (S, 2F)

    wr = complex_weight[..., 0].reshape(F, C).astype(jnp.float32)
    wi = complex_weight[..., 1].reshape(F, C).astype(jnp.float32)
    xf32 = x.astype(jnp.float32)

    # Channel tiling: lane-dense 128-multiple tiles when possible.  When C is
    # not a multiple of 128 (e.g. C = 64) keep the full channel extent
    # un-padded everywhere (full-extent last dims are exempt from the 128-lane
    # rule): no host-side pad of x, no padded output + post-slice, so HBM
    # traffic is exactly one read of x and one write of y.
    if C % 128 == 0:
        tc = next(t for t in (512, 256, 128) if C % t == 0)
        n_ct = C // tc
    else:
        tc = C
        n_ct = 1

    # Batch rows per grid step: amortizes per-step overhead, longer DMAs.
    nb = next(d for d in (4, 2, 1) if B % d == 0)

    # Channel tiles OUTER, batch INNER: the Wr/Wi block index only depends on
    # the outer axis, so it is constant across consecutive (inner) steps and
    # Pallas skips re-DMAing them.  KF/IG use a constant index_map and stay
    # resident in VMEM for the whole grid.
    grid = (n_ct, B // nb)

    kernel = functools.partial(_global_filter_kernel, nfreq=F, nb=nb)

    out = pl.pallas_call(
        kernel,
        out_shape=jax.ShapeDtypeStruct((B, S, C), jnp.float32),
        grid=grid,
        in_specs=[
            pl.BlockSpec((nb, S, tc), lambda c, i: (i, 0, c)),   # x (native layout)
            pl.BlockSpec((2 * F, S), lambda c, i: (0, 0)),       # KF  (VMEM-resident)
            pl.BlockSpec((F, tc), lambda c, i: (0, c)),          # Wr  (per channel tile)
            pl.BlockSpec((F, tc), lambda c, i: (0, c)),          # Wi
            pl.BlockSpec((S, 2 * F), lambda c, i: (0, 0)),       # IG  (VMEM-resident)
        ],
        out_specs=pl.BlockSpec((nb, S, tc), lambda c, i: (i, 0, c)),
        scratch_shapes=[pltpu.VMEM((2 * F, tc), jnp.bfloat16)],  # [Yr; Yi]
        compiler_params=pltpu.CompilerParams(
            dimension_semantics=("parallel", "parallel"),
            vmem_limit_bytes=32 * 1024 * 1024),
    )(xf32, kf, wr, wi, ig)

    return out


def _reference_forward(x, complex_weight, spatial_size=None):
    """Numpy reference with the exact torch.fft semantics (rfft2/irfft2, ortho)."""
    x_np = np.asarray(x, dtype=np.float32)
    cw = np.asarray(complex_weight, dtype=np.float32)
    B, N, C = x_np.shape
    if spatial_size is None:
        a = b = int(math.sqrt(N))
    else:
        a, b = spatial_size
    xi = x_np.reshape(B, a, b, C)
    xf = np.fft.rfft2(xi, axes=(1, 2), norm="ortho")
    xf = xf * (cw[..., 0] + 1j * cw[..., 1])
    y = np.fft.irfft2(xf, s=(a, b), axes=(1, 2), norm="ortho")
    return y.reshape(B, N, C).astype(np.float32)


def _check(out, x, cw, shape):
    ref = _reference_forward(x, cw)
    out_np = np.asarray(out)
    assert out.shape == shape, (out.shape, shape)
    max_err = float(np.max(np.abs(out_np - ref)))
    rel_err = float(np.linalg.norm(out_np - ref) / np.linalg.norm(ref))
    assert max_err < 5e-3 and rel_err < 1e-2, (max_err, rel_err)


if __name__ == "__main__":
    # Module defaults h=14, w=8  =>  a = b = 14, N = 196.
    h, w = 14, 8
    a_sp = b_sp = 14
    N = a_sp * b_sp

    key = jax.random.PRNGKey(0)
    k1, k2, k3, k4 = jax.random.split(key, 4)

    # Case 1: small hidden dim (C % 128 != 0) -> un-padded full-extent path.
    B1, dim1 = 2, 64
    x1 = jax.random.normal(k1, (B1, N, dim1), dtype=jnp.float32)
    cw1 = 0.02 * jax.random.normal(k2, (h, w, dim1, 2), dtype=jnp.float32)
    out1 = jax.block_until_ready(global_filter_forward(x1, cw1))
    _check(out1, x1, cw1, (B1, N, dim1))

    # Case 2: lane-dense multi-tile path (C % 128 == 0, 3 channel tiles,
    # 2 batch blocks) exercising W residency across the inner batch axis.
    B2, dim2 = 8, 384
    x2 = jax.random.normal(k3, (B2, N, dim2), dtype=jnp.float32)
    cw2 = 0.02 * jax.random.normal(k4, (h, w, dim2, 2), dtype=jnp.float32)
    out2 = jax.block_until_ready(global_filter_forward(x2, cw2))
    _check(out2, x2, cw2, (B2, N, dim2))

    print("KERNEL_OK")
</pallas_src>

<mosaic_0001>
module attributes {stable_mosaic.version = 11 : i64} {
  func.func @_global_filter_kernel(%arg0: i32, %arg1: i32, %arg2: memref<2x196x64xf32, #tpu.memory_space<vmem>>, %arg3: memref<224x196xbf16, #tpu.memory_space<vmem>>, %arg4: memref<112x64xf32, #tpu.memory_space<vmem>>, %arg5: memref<112x64xf32, #tpu.memory_space<vmem>>, %arg6: memref<196x224xbf16, #tpu.memory_space<vmem>>, %arg7: memref<2x196x64xf32, #tpu.memory_space<vmem>>, %arg8: memref<224x64xbf16, #tpu.memory_space<vmem>>) attributes {dimension_semantics = [#tpu.dimension_semantics<parallel>, #tpu.dimension_semantics<parallel>], iteration_bounds = array<i64: 1, 1>, scalar_prefetch = 0 : i64, scratch_operands = 1 : i64, tpu.core_type = #tpu.core_type<tc>, window_params = [{transform_indices = @transform_0, window_bounds = array<i64: 2, 196, 64>}, {pipeline_mode = #tpu.pipeline_mode<synchronous>, transform_indices = @transform_1, window_bounds = array<i64: 224, 196>}, {transform_indices = @transform_2, window_bounds = array<i64: 112, 64>}, {transform_indices = @transform_3, window_bounds = array<i64: 112, 64>}, {pipeline_mode = #tpu.pipeline_mode<synchronous>, transform_indices = @transform_4, window_bounds = array<i64: 196, 224>}, {transform_indices = @transform_5, window_bounds = array<i64: 2, 196, 64>}]} {
    %c0 = arith.constant 0 : index
    %c0_0 = arith.constant 0 : index
    %0 = vector.load %arg3[%c0, %c0_0] : memref<224x196xbf16, #tpu.memory_space<vmem>>, vector<224x196xbf16>
    %c0_1 = arith.constant 0 : index
    %c0_2 = arith.constant 0 : index
    %1 = vector.load %arg6[%c0_1, %c0_2] : memref<196x224xbf16, #tpu.memory_space<vmem>>, vector<196x224xbf16>
    %c0_3 = arith.constant 0 : index
    %c0_4 = arith.constant 0 : index
    %2 = vector.load %arg4[%c0_3, %c0_4] : memref<112x64xf32, #tpu.memory_space<vmem>>, vector<112x64xf32>
    %c0_5 = arith.constant 0 : index
    %c0_6 = arith.constant 0 : index
    %3 = vector.load %arg5[%c0_5, %c0_6] : memref<112x64xf32, #tpu.memory_space<vmem>>, vector<112x64xf32>
    %c0_7 = arith.constant 0 : index
    %c0_8 = arith.constant 0 : index
    %c0_9 = arith.constant 0 : index
    %4 = vector.load %arg2[%c0_7, %c0_8, %c0_9] : memref<2x196x64xf32, #tpu.memory_space<vmem>>, vector<1x196x64xf32>
    %5 = vector.shape_cast %4 : vector<1x196x64xf32> to vector<196x64xf32>
    %6 = arith.truncf %5 : vector<196x64xf32> to vector<196x64xbf16>
    %cst = arith.constant dense<0.000000e+00> : vector<224x64xf32>
    %7 = tpu.matmul %0, %6, %cst {dimension_numbers = #tpu.dot_dimension_numbers<[1], [0], [0], [1], [0, 0, 1, 1], [], []>} : vector<224x196xbf16>, vector<196x64xbf16>, vector<224x64xf32> -> vector<224x64xf32>
    %8 = vector.extract_strided_slice %7 {offsets = [0, 0], sizes = [112, 64], strides = [1, 1]} : vector<224x64xf32> to vector<112x64xf32>
    %9 = vector.extract_strided_slice %7 {offsets = [112, 0], sizes = [112, 64], strides = [1, 1]} : vector<224x64xf32> to vector<112x64xf32>
    %10 = arith.mulf %8, %2 : vector<112x64xf32>
    %11 = arith.mulf %9, %3 : vector<112x64xf32>
    %12 = arith.subf %10, %11 : vector<112x64xf32>
    %13 = arith.truncf %12 : vector<112x64xf32> to vector<112x64xbf16>
    %c0_10 = arith.constant 0 : index
    %c0_11 = arith.constant 0 : index
    %14 = vector.load %arg8[%c0_10, %c0_11] : memref<224x64xbf16, #tpu.memory_space<vmem>>, vector<112x64xbf16>
    tpu.vector_store %arg8[%c0_10, %c0_11], %13 {strides = array<i32>} : memref<224x64xbf16, #tpu.memory_space<vmem>>, vector<112x64xbf16>,
    %15 = arith.mulf %8, %3 : vector<112x64xf32>
    %16 = arith.mulf %9, %2 : vector<112x64xf32>
    %17 = arith.addf %15, %16 : vector<112x64xf32>
    %18 = arith.truncf %17 : vector<112x64xf32> to vector<112x64xbf16>
    %c112 = arith.constant 112 : index
    %c0_12 = arith.constant 0 : index
    %19 = vector.load %arg8[%c112, %c0_12] : memref<224x64xbf16, #tpu.memory_space<vmem>>, vector<112x64xbf16>
    tpu.vector_store %arg8[%c112, %c0_12], %18 {strides = array<i32>} : memref<224x64xbf16, #tpu.memory_space<vmem>>, vector<112x64xbf16>,
    %c0_13 = arith.constant 0 : index
    %c0_14 = arith.constant 0 : index
    %20 = vector.load %arg8[%c0_13, %c0_14] : memref<224x64xbf16, #tpu.memory_space<vmem>>, vector<224x64xbf16>
    %cst_15 = arith.constant dense<0.000000e+00> : vector<196x64xf32>
    %21 = tpu.matmul %1, %20, %cst_15 {dimension_numbers = #tpu.dot_dimension_numbers<[1], [0], [0], [1], [0, 0, 1, 1], [], []>} : vector<196x224xbf16>, vector<224x64xbf16>, vector<196x64xf32> -> vector<196x64xf32>
    %c0_16 = arith.constant 0 : index
    %c0_17 = arith.constant 0 : index
    %c0_18 = arith.constant 0 : index
    %22 = vector.load %arg7[%c0_16, %c0_17, %c0_18] : memref<2x196x64xf32, #tpu.memory_space<vmem>>, vector<1x196x64xf32>
    %23 = vector.shape_cast %22 : vector<1x196x64xf32> to vector<196x64xf32>
    %24 = vector.shape_cast %21 : vector<196x64xf32> to vector<1x196x64xf32>
    tpu.vector_store %arg7[%c0_16, %c0_17, %c0_18], %24 {strides = array<i32>} : memref<2x196x64xf32, #tpu.memory_space<vmem>>, vector<1x196x64xf32>,
    %c1 = arith.constant 1 : index
    %c0_19 = arith.constant 0 : index
    %c0_20 = arith.constant 0 : index
    %25 = vector.load %arg2[%c1, %c0_19, %c0_20] : memref<2x196x64xf32, #tpu.memory_space<vmem>>, vector<1x196x64xf32>
    %26 = vector.shape_cast %25 : vector<1x196x64xf32> to vector<196x64xf32>
    %27 = arith.truncf %26 : vector<196x64xf32> to vector<196x64xbf16>
    %cst_21 = arith.constant dense<0.000000e+00> : vector<224x64xf32>
    %28 = tpu.matmul %0, %27, %cst_21 {dimension_numbers = #tpu.dot_dimension_numbers<[1], [0], [0], [1], [0, 0, 1, 1], [], []>} : vector<224x196xbf16>, vector<196x64xbf16>, vector<224x64xf32> -> vector<224x64xf32>
    %29 = vector.extract_strided_slice %28 {offsets = [0, 0], sizes = [112, 64], strides = [1, 1]} : vector<224x64xf32> to vector<112x64xf32>
    %30 = vector.extract_strided_slice %28 {offsets = [112, 0], sizes = [112, 64], strides = [1, 1]} : vector<224x64xf32> to vector<112x64xf32>
    %31 = arith.mulf %29, %2 : vector<112x64xf32>
    %32 = arith.mulf %30, %3 : vector<112x64xf32>
    %33 = arith.subf %31, %32 : vector<112x64xf32>
    %34 = arith.truncf %33 : vector<112x64xf32> to vector<112x64xbf16>
    %c0_22 = arith.constant 0 : index
    %c0_23 = arith.constant 0 : index
    %35 = vector.load %arg8[%c0_22, %c0_23] : memref<224x64xbf16, #tpu.memory_space<vmem>>, vector<112x64xbf16>
    tpu.vector_store %arg8[%c0_22, %c0_23], %34 {strides = array<i32>} : memref<224x64xbf16, #tpu.memory_space<vmem>>, vector<112x64xbf16>,
    %36 = arith.mulf %29, %3 : vector<112x64xf32>
    %37 = arith.mulf %30, %2 : vector<112x64xf32>
    %38 = arith.addf %36, %37 : vector<112x64xf32>
    %39 = arith.truncf %38 : vector<112x64xf32> to vector<112x64xbf16>
    %c112_24 = arith.constant 112 : index
    %c0_25 = arith.constant 0 : index
    %40 = vector.load %arg8[%c112_24, %c0_25] : memref<224x64xbf16, #tpu.memory_space<vmem>>, vector<112x64xbf16>
    tpu.vector_store %arg8[%c112_24, %c0_25], %39 {strides = array<i32>} : memref<224x64xbf16, #tpu.memory_space<vmem>>, vector<112x64xbf16>,
    %c0_26 = arith.constant 0 : index
    %c0_27 = arith.constant 0 : index
    %41 = vector.load %arg8[%c0_26, %c0_27] : memref<224x64xbf16, #tpu.memory_space<vmem>>, vector<224x64xbf16>
    %cst_28 = arith.constant dense<0.000000e+00> : vector<196x64xf32>
    %42 = tpu.matmul %1, %41, %cst_28 {dimension_numbers = #tpu.dot_dimension_numbers<[1], [0], [0], [1], [0, 0, 1, 1], [], []>} : vector<196x224xbf16>, vector<224x64xbf16>, vector<196x64xf32> -> vector<196x64xf32>
    %c1_29 = arith.constant 1 : index
    %c0_30 = arith.constant 0 : index
    %c0_31 = arith.constant 0 : index
    %43 = vector.load %arg7[%c1_29, %c0_30, %c0_31] : memref<2x196x64xf32, #tpu.memory_space<vmem>>, vector<1x196x64xf32>
    %44 = vector.shape_cast %43 : vector<1x196x64xf32> to vector<196x64xf32>
    %45 = vector.shape_cast %42 : vector<196x64xf32> to vector<1x196x64xf32>
    tpu.vector_store %arg7[%c1_29, %c0_30, %c0_31], %45 {strides = array<i32>} : memref<2x196x64xf32, #tpu.memory_space<vmem>>, vector<1x196x64xf32>,
    return
  }
  func.func @transform_0(%arg0: i32, %arg1: i32) -> (i32, i32, i32) {
    %c0_i32 = arith.constant 0 : i32
    %c0_i32_0 = arith.constant 0 : i32
    return %arg1, %c0_i32, %arg0 : i32, i32, i32
  }
  func.func @transform_1(%arg0: i32, %arg1: i32) -> (i32, i32) {
    %c0_i32 = arith.constant 0 : i32
    %c0_i32_0 = arith.constant 0 : i32
    %c0_i32_1 = arith.constant 0 : i32
    return %c0_i32, %c0_i32_0 : i32, i32
  }
  func.func @transform_2(%arg0: i32, %arg1: i32) -> (i32, i32) {
    %c0_i32 = arith.constant 0 : i32
    %c0_i32_0 = arith.constant 0 : i32
    return %c0_i32, %arg0 : i32, i32
  }
  func.func @transform_3(%arg0: i32, %arg1: i32) -> (i32, i32) {
    %c0_i32 = arith.constant 0 : i32
    %c0_i32_0 = arith.constant 0 : i32
    return %c0_i32, %arg0 : i32, i32
  }
  func.func @transform_4(%arg0: i32, %arg1: i32) -> (i32, i32) {
    %c0_i32 = arith.constant 0 : i32
    %c0_i32_0 = arith.constant 0 : i32
    %c0_i32_1 = arith.constant 0 : i32
    return %c0_i32, %c0_i32_0 : i32, i32
  }
  func.func @transform_5(%arg0: i32, %arg1: i32) -> (i32, i32, i32) {
    %c0_i32 = arith.constant 0 : i32
    %c0_i32_0 = arith.constant 0 : i32
    return %arg1, %c0_i32, %arg0 : i32, i32, i32
  }
}

</mosaic_0001>

<llo_original>
// kernel: tpu_custom_call.1
$region0: #{tpu_custom_call.1}
  #allocation0 [shape = 'u32[]', space=smem, size = 0x4, offset = 0x4, fixed_abs, tag = 'smem constant byte address 0x4 - core index']
  #allocation1 [shape = 'u32[72,128]{1,0:T(1,128)}', space=vmem, size = 0x9000, scoped, tag = 'internal scratch']
  #allocation2 [shape = 'bf16[224,64]{1,0:T(8,128)(2,1)}', space=vmem, size = 0xe000, scoped, tag = 'scratch operand']
  %s0 = inlined_call_operand.vmem [shape: f32[2,196,64], index: 0, kind: input, shape index: {}]
  %s1 = inlined_call_operand.vmem [shape: bf16[224,196], index: 1, kind: input, shape index: {}]
  %s2 = inlined_call_operand.vmem [shape: f32[112,64], index: 2, kind: input, shape index: {}]
  %s3 = inlined_call_operand.vmem [shape: f32[112,64], index: 3, kind: input, shape index: {}]
  %s4 = inlined_call_operand.vmem [shape: bf16[196,224], index: 4, kind: input, shape index: {}]
  %s5 = inlined_call_operand.vmem [shape: f32[2,196,64], index: 5, kind: output, shape index: {}]
  %s6 = sld [smem:[#allocation0]]
  $region30: #{tpu_custom_call.1} parent=0
    _
  %s8 = ssub.s32 1, %s6
  %s9 = scalar_select 0, %s8, %s6
  // Predicated region
  $region2: #{tpu_custom_call.1} parent=0 // pred_check
    _
  $region3: #{tpu_custom_call.1} parent=0 // pred_check_branch
    %11 = sbr.rel (0) target = $region5
  $region4: #{tpu_custom_call.1} parent=0 // pred_region
    _
  $region5: #{tpu_custom_call.1} parent=0 // pred_fallthru
    _
  // Predicated region
  $region6: #{tpu_custom_call.1} parent=0 // pred_check
    _
  $region7: #{tpu_custom_call.1} parent=0 // pred_check_branch
    %13 = sbr.rel (0) target = $region9
  $region8: #{tpu_custom_call.1} parent=0 // pred_region
    _
  $region9: #{tpu_custom_call.1} parent=0 // pred_fallthru
    _
  // Predicated region
  $region10: #{tpu_custom_call.1} parent=0 // pred_check
    _
  $region11: #{tpu_custom_call.1} parent=0 // pred_check_branch
    %15 = sbr.rel (0) target = $region13
  $region12: #{tpu_custom_call.1} parent=0 // pred_region
    _
  $region13: #{tpu_custom_call.1} parent=0 // pred_fallthru
    _
  // Predicated region
  $region14: #{tpu_custom_call.1} parent=0 // pred_check
    _
  $region15: #{tpu_custom_call.1} parent=0 // pred_check_branch
    %17 = sbr.rel (0) target = $region17
  $region16: #{tpu_custom_call.1} parent=0 // pred_region
    _
  $region17: #{tpu_custom_call.1} parent=0 // pred_fallthru
    _
  // Predicated region
  $region18: #{tpu_custom_call.1} parent=0 // pred_check
    _
  $region19: #{tpu_custom_call.1} parent=0 // pred_check_branch
    %19 = sbr.rel (0) target = $region21
  $region20: #{tpu_custom_call.1} parent=0 // pred_region
    _
  $region21: #{tpu_custom_call.1} parent=0 // pred_fallthru
    _
  %v21 = vld [vmem:[%s1] sm:$0xff]
  %v22 = vld [vmem:[%s1 + $0x8] sm:$0xff]
  %v23 = vld [vmem:[%s1 + $0x10] sm:$0xff]
  %v24 = vld [vmem:[%s1 + $0x18] sm:$0xff]
  %v25 = vld [vmem:[%s1 + $0x20] sm:$0xff]
  %v26 = vld [vmem:[%s1 + $0x28] sm:$0xff]
  %v27 = vld [vmem:[%s1 + $0x30] sm:$0xff]
  %v28 = vld [vmem:[%s1 + $0x38] sm:$0xff]
  %v29 = vld [vmem:[%s1 + $0x40] sm:$0xff]
  %v30 = vld [vmem:[%s1 + $0x48] sm:$0xff]
  %v31 = vld [vmem:[%s1 + $0x50] sm:$0xff]
  %v32 = vld [vmem:[%s1 + $0x58] sm:$0xff]
  %v33 = vld [vmem:[%s1 + $0x60] sm:$0xff]
  %v34 = vld [vmem:[%s1 + $0x68] sm:$0xff]
  %v35 = vld [vmem:[%s1 + $0x70] sm:$0xff]
  %v36 = vld [vmem:[%s1 + $0x78] sm:$0xff]
  %v37 = vld [vmem:[%s1 + $0x80] sm:$0xff]
  %v38 = vld [vmem:[%s1 + $0x88] sm:$0xff]
  %v39 = vld [vmem:[%s1 + $0x90] sm:$0xff]
  %v40 = vld [vmem:[%s1 + $0x98] sm:$0xff]
  %v41 = vld [vmem:[%s1 + $0xa0] sm:$0xff]
  %v42 = vld [vmem:[%s1 + $0xa8] sm:$0xff]
  %v43 = vld [vmem:[%s1 + $0xb0] sm:$0xff]
  %v44 = vld [vmem:[%s1 + $0xb8] sm:$0xff]
  %v45 = vld [vmem:[%s1 + $0xc0] sm:$0xff]
  %v46 = vld [vmem:[%s1 + $0xc8] sm:$0xff]
  %v47 = vld [vmem:[%s1 + $0xd0] sm:$0xff]
  %v48 = vld [vmem:[%s1 + $0xd8] sm:$0xff]
  %v49 = vld [vmem:[%s4] sm:$0xff]
  %v50 = vld [vmem:[%s4 + $0x8] sm:$0xff]
  %v51 = vld [vmem:[%s4 + $0x10] sm:$0xff]
  %v52 = vld [vmem:[%s4 + $0x18] sm:$0xff]
  %v53 = vld [vmem:[%s4 + $0x20] sm:$0xff]
  %v54 = vld [vmem:[%s4 + $0x28] sm:$0xff]
  %v55 = vld [vmem:[%s4 + $0x30] sm:$0xff]
  %v56 = vld [vmem:[%s4 + $0x38] sm:$0xff]
  %v57 = vld [vmem:[%s4 + $0x40] sm:$0xff]
  %v58 = vld [vmem:[%s4 + $0x48] sm:$0xff]
  %v59 = vld [vmem:[%s4 + $0x50] sm:$0xff]
  %v60 = vld [vmem:[%s4 + $0x58] sm:$0xff]
  %v61 = vld [vmem:[%s4 + $0x60] sm:$0xff]
  %v62 = vld [vmem:[%s4 + $0x68] sm:$0xff]
  %v63 = vld [vmem:[%s4 + $0x70] sm:$0xff]
  %v64 = vld [vmem:[%s4 + $0x78] sm:$0xff]
  %v65 = vld [vmem:[%s4 + $0x80] sm:$0xff]
  %v66 = vld [vmem:[%s4 + $0x88] sm:$0xff]
  %v67 = vld [vmem:[%s4 + $0x90] sm:$0xff]
  %v68 = vld [vmem:[%s4 + $0x98] sm:$0xff]
  %v69 = vld [vmem:[%s4 + $0xa0] sm:$0xff]
  %v70 = vld [vmem:[%s4 + $0xa8] sm:$0xff]
  %v71 = vld [vmem:[%s4 + $0xb0] sm:$0xff]
  %v72 = vld [vmem:[%s4 + $0xb8] sm:$0xff]
  %v73 = vld [vmem:[%s4 + $0xc0] sm:$0x33]
  %v74 = vld [vmem:[%s2] sm:$0xff]
  %v75 = vld [vmem:[%s2 + $0x8] sm:$0xff]
  %v76 = vld [vmem:[%s2 + $0x10] sm:$0xff]
  %v77 = vld [vmem:[%s2 + $0x18] sm:$0xff]
  %v78 = vld [vmem:[%s2 + $0x20] sm:$0xff]
  %v79 = vld [vmem:[%s2 + $0x28] sm:$0xff]
  %v80 = vld [vmem:[%s2 + $0x30] sm:$0xff]
  %v81 = vld [vmem:[%s2 + $0x38] sm:$0xff]
  %v82 = vld [vmem:[%s2 + $0x40] sm:$0xff]
  %v83 = vld [vmem:[%s2 + $0x48] sm:$0xff]
  %v84 = vld [vmem:[%s2 + $0x50] sm:$0xff]
  %v85 = vld [vmem:[%s2 + $0x58] sm:$0xff]
  %v86 = vld [vmem:[%s2 + $0x60] sm:$0xff]
  %v87 = vld [vmem:[%s2 + $0x68] sm:$0xff]
  %v88 = vld [vmem:[%s3] sm:$0xff]
  %v89 = vld [vmem:[%s3 + $0x8] sm:$0xff]
  %v90 = vld [vmem:[%s3 + $0x10] sm:$0xff]
  %v91 = vld [vmem:[%s3 + $0x18] sm:$0xff]
  %v92 = vld [vmem:[%s3 + $0x20] sm:$0xff]
  %v93 = vld [vmem:[%s3 + $0x28] sm:$0xff]
  %v94 = vld [vmem:[%s3 + $0x30] sm:$0xff]
  %v95 = vld [vmem:[%s3 + $0x38] sm:$0xff]
  %v96 = vld [vmem:[%s3 + $0x40] sm:$0xff]
  %v97 = vld [vmem:[%s3 + $0x48] sm:$0xff]
  %v98 = vld [vmem:[%s3 + $0x50] sm:$0xff]
  %v99 = vld [vmem:[%s3 + $0x58] sm:$0xff]
  %v100 = vld [vmem:[%s3 + $0x60] sm:$0xff]
  %v101 = vld [vmem:[%s3 + $0x68] sm:$0xff]
  %v102 = vld [vmem:[%s0] sm:$0xff]
  %v103 = vld [vmem:[%s0 + $0x8] sm:$0xff]
  %v104 = vld [vmem:[%s0 + $0x10] sm:$0xff]
  %v105 = vld [vmem:[%s0 + $0x18] sm:$0xff]
  %v106 = vld [vmem:[%s0 + $0x20] sm:$0xff]
  %v107 = vld [vmem:[%s0 + $0x28] sm:$0xff]
  %v108 = vld [vmem:[%s0 + $0x30] sm:$0xff]
  %v109 = vld [vmem:[%s0 + $0x38] sm:$0xff]
  %v110 = vld [vmem:[%s0 + $0x40] sm:$0xff]
  %v111 = vld [vmem:[%s0 + $0x48] sm:$0xff]
  %v112 = vld [vmem:[%s0 + $0x50] sm:$0xff]
  %v113 = vld [vmem:[%s0 + $0x58] sm:$0xff]
  %v114 = vld [vmem:[%s0 + $0x60] sm:$0xff]
  %v115 = vld [vmem:[%s0 + $0x68] sm:$0xff]
  %v116 = vld [vmem:[%s0 + $0x70] sm:$0xff]
  %v117 = vld [vmem:[%s0 + $0x78] sm:$0xff]
  %v118 = vld [vmem:[%s0 + $0x80] sm:$0xff]
  %v119 = vld [vmem:[%s0 + $0x88] sm:$0xff]
  %v120 = vld [vmem:[%s0 + $0x90] sm:$0xff]
  %v121 = vld [vmem:[%s0 + $0x98] sm:$0xff]
  %v122 = vld [vmem:[%s0 + $0xa0] sm:$0xff]
  %v123 = vld [vmem:[%s0 + $0xa8] sm:$0xff]
  %v124 = vld [vmem:[%s0 + $0xb0] sm:$0xff]
  %v125 = vld [vmem:[%s0 + $0xb8] sm:$0xff]
  %v126 = vld [vmem:[%s0 + $0xc0] sm:$0xf]
  %v127 = vpack.c.bf16 %v103, %v102
  %v128 = vpack.c.bf16 %v105, %v104
  %v129 = vpack.c.bf16 %v107, %v106
  %v130 = vpack.c.bf16 %v109, %v108
  %v131 = vpack.c.bf16 %v111, %v110
  %v132 = vpack.c.bf16 %v113, %v112
  %v133 = vpack.c.bf16 %v115, %v114
  %v134 = vpack.c.bf16 %v117, %v116
  %v135 = vpack.c.bf16 %v119, %v118
  %v136 = vpack.c.bf16 %v121, %v120
  %v137 = vpack.c.bf16 %v123, %v122
  %v138 = vpack.c.bf16 %v125, %v124
  %v139 = vpack.c.bf16 %v126, %v126
  %v168 = vunpack.c.l.b16 %v21
  %v169 = vunpack.c.h.b16 %v21
  %v170 = vunpack.c.l.b16 %v22
  %v171 = vunpack.c.h.b16 %v22
  %v172 = vunpack.c.l.b16 %v23
  %v173 = vunpack.c.h.b16 %v23
  %v174 = vunpack.c.l.b16 %v24
  %v175 = vunpack.c.h.b16 %v24
  %v176 = vunpack.c.l.b16 %v25
  %v177 = vunpack.c.h.b16 %v25
  %v178 = vunpack.c.l.b16 %v26
  %v179 = vunpack.c.h.b16 %v26
  %v180 = vunpack.c.l.b16 %v27
  %v181 = vunpack.c.h.b16 %v27
  %v182 = vunpack.c.l.b16 %v28
  %v183 = vunpack.c.h.b16 %v28
  %v184 = vunpack.c.l.b16 %v29
  %v185 = vunpack.c.h.b16 %v29
  %v186 = vunpack.c.l.b16 %v30
  %v187 = vunpack.c.h.b16 %v30
  %v188 = vunpack.c.l.b16 %v31
  %v189 = vunpack.c.h.b16 %v31
  %v190 = vunpack.c.l.b16 %v32
  %v191 = vunpack.c.h.b16 %v32
  %v192 = vunpack.c.l.b16 %v33
  %v193 = vunpack.c.h.b16 %v33
  %v194 = vunpack.c.l.b16 %v34
  %v195 = vunpack.c.h.b16 %v34
  %v196 = vunpack.c.l.b16 %v35
  %v197 = vunpack.c.h.b16 %v35
  %v198 = vunpack.c.l.b16 %v36
  %v199 = vunpack.c.h.b16 %v36
  %v200 = vunpack.c.l.b16 %v37
  %v201 = vunpack.c.h.b16 %v37
  %v202 = vunpack.c.l.b16 %v38
  %v203 = vunpack.c.h.b16 %v38
  %v204 = vunpack.c.l.b16 %v39
  %v205 = vunpack.c.h.b16 %v39
  %v206 = vunpack.c.l.b16 %v40
  %v207 = vunpack.c.h.b16 %v40
  %v208 = vunpack.c.l.b16 %v41
  %v209 = vunpack.c.h.b16 %v41
  %v210 = vunpack.c.l.b16 %v42
  %v211 = vunpack.c.h.b16 %v42
  %v212 = vunpack.c.l.b16 %v43
  %v213 = vunpack.c.h.b16 %v43
  %v214 = vunpack.c.l.b16 %v44
  %v215 = vunpack.c.h.b16 %v44
  %v216 = vunpack.c.l.b16 %v45
  %v217 = vunpack.c.h.b16 %v45
  %v218 = vunpack.c.l.b16 %v46
  %v219 = vunpack.c.h.b16 %v46
  %v220 = vunpack.c.l.b16 %v47
  %v221 = vunpack.c.h.b16 %v47
  %v222 = vunpack.c.l.b16 %v48
  %v223 = vunpack.c.h.b16 %v48
  %v224 = vpack.c.b16 %v170, %v168
  %v225 = vpack.c.b16 %v171, %v169
  %v226 = vpack.c.b16 %v174, %v172
  %v227 = vpack.c.b16 %v175, %v173
  %v228 = vpack.c.b16 %v178, %v176
  %v229 = vpack.c.b16 %v179, %v177
  %v230 = vpack.c.b16 %v182, %v180
  %v231 = vpack.c.b16 %v183, %v181
  %v232 = vpack.c.b16 %v186, %v184
  %v233 = vpack.c.b16 %v187, %v185
  %v234 = vpack.c.b16 %v190, %v188
  %v235 = vpack.c.b16 %v191, %v189
  %v236 = vpack.c.b16 %v194, %v192
  %v237 = vpack.c.b16 %v195, %v193
  %v238 = vpack.c.b16 %v198, %v196
  %v239 = vpack.c.b16 %v199, %v197
  %v240 = vpack.c.b16 %v202, %v200
  %v241 = vpack.c.b16 %v203, %v201
  %v242 = vpack.c.b16 %v206, %v204
  %v243 = vpack.c.b16 %v207, %v205
  %v244 = vpack.c.b16 %v210, %v208
  %v245 = vpack.c.b16 %v211, %v209
  %v246 = vpack.c.b16 %v214, %v212
  %v247 = vpack.c.b16 %v215, %v213
  %v248 = vpack.c.b16 %v218, %v216
  %v249 = vpack.c.b16 %v219, %v217
  %v250 = vpack.c.b16 %v222, %v220
  %v251 = vpack.c.b16 %v223, %v221
  %vm266 = vcmask 556032
  %v268 = vsel %vm266, %v225, 0
  %v271 = vsel %vm266, %v227, 0
  %v274 = vsel %vm266, %v229, 0
  %v277 = vsel %vm266, %v231, 0
  %v280 = vsel %vm266, %v233, 0
  %v283 = vsel %vm266, %v235, 0
  %v286 = vsel %vm266, %v237, 0
  %v289 = vsel %vm266, %v239, 0
  %v292 = vsel %vm266, %v241, 0
  %v295 = vsel %vm266, %v243, 0
  %v298 = vsel %vm266, %v245, 0
  %v301 = vsel %vm266, %v247, 0
  %v304 = vsel %vm266, %v249, 0
  %v307 = vsel %vm266, %v251, 0
  %vm309 = vcmask 1041408
  %v311 = vsel %vm309, %v139, 0
  %313 = vmatpush.bf16.msra.mxu0 %v134
  %314 = vmatpush.bf16.msra.mxu0 %v133
  %315 = vmatpush.bf16.msra.mxu0 %v132
  %316 = vmatpush.bf16.msra.mxu0 %v131
  %317 = vmatpush.bf16.msra.mxu0 %v130
  %318 = vmatpush.bf16.msra.mxu0 %v129
  %319 = vmatpush.bf16.msra.mxu0 %v128
  %320 = vmatpush.bf16.msra.mxu0 %v127
  %321 = vmatmul.bf16.gmra.mxu0 %v224
  %v322 = vpop.f32.mrf.mxu0
  %v323 = vadd.f32 0.0, %v322
  %v324 = vpop.f32.mrf.mxu0
  %v325 = vadd.f32 0.0, %v324
  %326 = vmatmul.bf16.gmra.mxu0 %v226
  %v327 = vpop.f32.mrf.mxu0
  %v328 = vadd.f32 0.0, %v327
  %v329 = vpop.f32.mrf.mxu0
  %v330 = vadd.f32 0.0, %v329
  %331 = vmatmul.bf16.gmra.mxu0 %v228
  %v332 = vpop.f32.mrf.mxu0
  %v333 = vadd.f32 0.0, %v332
  %v334 = vpop.f32.mrf.mxu0
  %v335 = vadd.f32 0.0, %v334
  %336 = vmatmul.bf16.gmra.mxu0 %v230
  %v337 = vpop.f32.mrf.mxu0
  %v338 = vadd.f32 0.0, %v337
  %v339 = vpop.f32.mrf.mxu0
  %v340 = vadd.f32 0.0, %v339
  %341 = vmatmul.bf16.gmra.mxu0 %v232
  %v342 = vpop.f32.mrf.mxu0
  %v343 = vadd.f32 0.0, %v342
  %v344 = vpop.f32.mrf.mxu0
  %v345 = vadd.f32 0.0, %v344
  %346 = vmatmul.bf16.gmra.mxu0 %v234
  %v347 = vpop.f32.mrf.mxu0
  %v348 = vadd.f32 0.0, %v347
  %v349 = vpop.f32.mrf.mxu0
  %v350 = vadd.f32 0.0, %v349
  %351 = vmatmul.bf16.gmra.mxu0 %v236
  %v352 = vpop.f32.mrf.mxu0
  %v353 = vadd.f32 0.0, %v352
  %v354 = vpop.f32.mrf.mxu0
  %v355 = vadd.f32 0.0, %v354
  %356 = vmatmul.bf16.gmra.mxu0 %v238
  %v357 = vpop.f32.mrf.mxu0
  %v358 = vadd.f32 0.0, %v357
  %v359 = vpop.f32.mrf.mxu0
  %v360 = vadd.f32 0.0, %v359
  %361 = vmatmul.bf16.gmra.mxu0 %v240
  %v362 = vpop.f32.mrf.mxu0
  %v363 = vadd.f32 0.0, %v362
  %v364 = vpop.f32.mrf.mxu0
  %v365 = vadd.f32 0.0, %v364
  %366 = vmatmul.bf16.gmra.mxu0 %v242
  %v367 = vpop.f32.mrf.mxu0
  %v368 = vadd.f32 0.0, %v367
  %v369 = vpop.f32.mrf.mxu0
  %v370 = vadd.f32 0.0, %v369
  %371 = vmatmul.bf16.gmra.mxu0 %v244
  %v372 = vpop.f32.mrf.mxu0
  %v373 = vadd.f32 0.0, %v372
  %v374 = vpop.f32.mrf.mxu0
  %v375 = vadd.f32 0.0, %v374
  %376 = vmatmul.bf16.gmra.mxu0 %v246
  %v377 = vpop.f32.mrf.mxu0
  %v378 = vadd.f32 0.0, %v377
  %v379 = vpop.f32.mrf.mxu0
  %v380 = vadd.f32 0.0, %v379
  %381 = vmatmul.bf16.gmra.mxu0 %v248
  %v382 = vpop.f32.mrf.mxu0
  %v383 = vadd.f32 0.0, %v382
  %v384 = vpop.f32.mrf.mxu0
  %v385 = vadd.f32 0.0, %v384
  %386 = vmatmul.bf16.gmra.mxu0 %v250
  %v387 = vpop.f32.mrf.mxu0
  %v388 = vadd.f32 0.0, %v387
  %v389 = vpop.f32.mrf.mxu0
  %v390 = vadd.f32 0.0, %v389
  %391 = vdwg.mxu0
  %392 = vmatpush.bf16.msra.mxu0 0
  %393 = vmatpush.bf16.msra.mxu0 0
  %394 = vmatpush.bf16.msra.mxu0 0
  %395 = vmatpush.bf16.msra.mxu0 %v311
  %396 = vmatpush.bf16.msra.mxu0 %v138
  %397 = vmatpush.bf16.msra.mxu0 %v137
  %398 = vmatpush.bf16.msra.mxu0 %v136
  %399 = vmatpush.bf16.msra.mxu0 %v135
  %400 = vmatmul.bf16.gmra.mxu0 %v268
  %v401 = vpop.f32.mrf.mxu0
  %v402 = vadd.f32 %v323, %v401
  %v403 = vpop.f32.mrf.mxu0
  %v404 = vadd.f32 %v325, %v403
  %405 = vmatmul.bf16.gmra.mxu0 %v271
  %v406 = vpop.f32.mrf.mxu0
  %v407 = vadd.f32 %v328, %v406
  %v408 = vpop.f32.mrf.mxu0
  %v409 = vadd.f32 %v330, %v408
  %410 = vmatmul.bf16.gmra.mxu0 %v274
  %v411 = vpop.f32.mrf.mxu0
  %v412 = vadd.f32 %v333, %v411
  %v413 = vpop.f32.mrf.mxu0
  %v414 = vadd.f32 %v335, %v413
  %415 = vmatmul.bf16.gmra.mxu0 %v277
  %v416 = vpop.f32.mrf.mxu0
  %v417 = vadd.f32 %v338, %v416
  %v418 = vpop.f32.mrf.mxu0
  %v419 = vadd.f32 %v340, %v418
  %420 = vmatmul.bf16.gmra.mxu0 %v280
  %v421 = vpop.f32.mrf.mxu0
  %v422 = vadd.f32 %v343, %v421
  %v423 = vpop.f32.mrf.mxu0
  %v424 = vadd.f32 %v345, %v423
  %425 = vmatmul.bf16.gmra.mxu0 %v283
  %v426 = vpop.f32.mrf.mxu0
  %v427 = vadd.f32 %v348, %v426
  %v428 = vpop.f32.mrf.mxu0
  %v429 = vadd.f32 %v350, %v428
  %430 = vmatmul.bf16.gmra.mxu0 %v286
  %v431 = vpop.f32.mrf.mxu0
  %v432 = vadd.f32 %v353, %v431
  %v433 = vpop.f32.mrf.mxu0
  %v434 = vadd.f32 %v355, %v433
  %435 = vmatmul.bf16.gmra.mxu0 %v289
  %v436 = vpop.f32.mrf.mxu0
  %v437 = vadd.f32 %v358, %v436
  %v438 = vpop.f32.mrf.mxu0
  %v439 = vadd.f32 %v360, %v438
  %440 = vmatmul.bf16.gmra.mxu0 %v292
  %v441 = vpop.f32.mrf.mxu0
  %v442 = vadd.f32 %v363, %v441
  %v443 = vpop.f32.mrf.mxu0
  %v444 = vadd.f32 %v365, %v443
  %445 = vmatmul.bf16.gmra.mxu0 %v295
  %v446 = vpop.f32.mrf.mxu0
  %v447 = vadd.f32 %v368, %v446
  %v448 = vpop.f32.mrf.mxu0
  %v449 = vadd.f32 %v370, %v448
  %450 = vmatmul.bf16.gmra.mxu0 %v298
  %v451 = vpop.f32.mrf.mxu0
  %v452 = vadd.f32 %v373, %v451
  %v453 = vpop.f32.mrf.mxu0
  %v454 = vadd.f32 %v375, %v453
  %455 = vmatmul.bf16.gmra.mxu0 %v301
  %v456 = vpop.f32.mrf.mxu0
  %v457 = vadd.f32 %v378, %v456
  %v458 = vpop.f32.mrf.mxu0
  %v459 = vadd.f32 %v380, %v458
  %460 = vmatmul.bf16.gmra.mxu0 %v304
  %v461 = vpop.f32.mrf.mxu0
  %v462 = vadd.f32 %v383, %v461
  %v463 = vpop.f32.mrf.mxu0
  %v464 = vadd.f32 %v385, %v463
  %465 = vmatmul.bf16.gmra.mxu0 %v307
  %v466 = vpop.f32.mrf.mxu0
  %v467 = vadd.f32 %v388, %v466
  %v468 = vpop.f32.mrf.mxu0
  %v469 = vadd.f32 %v390, %v468
  %470 = vdwg.mxu0
  %v471 = vmul.f32 %v402, %v74
  %v472 = vmul.f32 %v404, %v75
  %v473 = vmul.f32 %v407, %v76
  %v474 = vmul.f32 %v409, %v77
  %v475 = vmul.f32 %v412, %v78
  %v476 = vmul.f32 %v414, %v79
  %v477 = vmul.f32 %v417, %v80
  %v478 = vmul.f32 %v419, %v81
  %v479 = vmul.f32 %v422, %v82
  %v480 = vmul.f32 %v424, %v83
  %v481 = vmul.f32 %v427, %v84
  %v482 = vmul.f32 %v429, %v85
  %v483 = vmul.f32 %v432, %v86
  %v484 = vmul.f32 %v434, %v87
  %v485 = vmul.f32 %v437, %v88
  %v486 = vmul.f32 %v439, %v89
  %v487 = vmul.f32 %v442, %v90
  %v488 = vmul.f32 %v444, %v91
  %v489 = vmul.f32 %v447, %v92
  %v490 = vmul.f32 %v449, %v93
  %v491 = vmul.f32 %v452, %v94
  %v492 = vmul.f32 %v454, %v95
  %v493 = vmul.f32 %v457, %v96
  %v494 = vmul.f32 %v459, %v97
  %v495 = vmul.f32 %v462, %v98
  %v496 = vmul.f32 %v464, %v99
  %v497 = vmul.f32 %v467, %v100
  %v498 = vmul.f32 %v469, %v101
  %v499 = vsub.f32 %v471, %v485
  %v500 = vsub.f32 %v472, %v486
  %v501 = vsub.f32 %v473, %v487
  %v502 = vsub.f32 %v474, %v488
  %v503 = vsub.f32 %v475, %v489
  %v504 = vsub.f32 %v476, %v490
  %v505 = vsub.f32 %v477, %v491
  %v506 = vsub.f32 %v478, %v492
  %v507 = vsub.f32 %v479, %v493
  %v508 = vsub.f32 %v480, %v494
  %v509 = vsub.f32 %v481, %v495
  %v510 = vsub.f32 %v482, %v496
  %v511 = vsub.f32 %v483, %v497
  %v512 = vsub.f32 %v484, %v498
  %v513 = vpack.c.bf16 %v499, %v499
  %v514 = vpack.c.bf16 %v500, %v500
  %v515 = vpack.c.bf16 %v501, %v501
  %v516 = vpack.c.bf16 %v502, %v502
  %v517 = vpack.c.bf16 %v503, %v503
  %v518 = vpack.c.bf16 %v504, %v504
  %v519 = vpack.c.bf16 %v505, %v505
  %v520 = vpack.c.bf16 %v506, %v506
  %v521 = vpack.c.bf16 %v507, %v507
  %v522 = vpack.c.bf16 %v508, %v508
  %v523 = vpack.c.bf16 %v509, %v509
  %v524 = vpack.c.bf16 %v510, %v510
  %v525 = vpack.c.bf16 %v511, %v511
  %v526 = vpack.c.bf16 %v512, %v512
  %vm527 = vcmask 519168
  %528 = vst.msk [vmem:[#allocation2] sm:$0xf] %vm527, %v513
  %529 = vst.msk [vmem:[#allocation2 + $0x4] sm:$0xf] %vm527, %v514
  %530 = vst.msk [vmem:[#allocation2 + $0x8] sm:$0xf] %vm527, %v515
  %531 = vst.msk [vmem:[#allocation2 + $0xc] sm:$0xf] %vm527, %v516
  %532 = vst.msk [vmem:[#allocation2 + $0x10] sm:$0xf] %vm527, %v517
  %533 = vst.msk [vmem:[#allocation2 + $0x14] sm:$0xf] %vm527, %v518
  %534 = vst.msk [vmem:[#allocation2 + $0x18] sm:$0xf] %vm527, %v519
  %535 = vst.msk [vmem:[#allocation2 + $0x1c] sm:$0xf] %vm527, %v520
  %536 = vst.msk [vmem:[#allocation2 + $0x20] sm:$0xf] %vm527, %v521
  %537 = vst.msk [vmem:[#allocation2 + $0x24] sm:$0xf] %vm527, %v522
  %538 = vst.msk [vmem:[#allocation2 + $0x28] sm:$0xf] %vm527, %v523
  %539 = vst.msk [vmem:[#allocation2 + $0x2c] sm:$0xf] %vm527, %v524
  %540 = vst.msk [vmem:[#allocation2 + $0x30] sm:$0xf] %vm527, %v525
  %541 = vst.msk [vmem:[#allocation2 + $0x34] sm:$0xf] %vm527, %v526
  %v542 = vmul.f32 %v402, %v88
  %v543 = vmul.f32 %v404, %v89
  %v544 = vmul.f32 %v407, %v90
  %v545 = vmul.f32 %v409, %v91
  %v546 = vmul.f32 %v412, %v92
  %v547 = vmul.f32 %v414, %v93
  %v548 = vmul.f32 %v417, %v94
  %v549 = vmul.f32 %v419, %v95
  %v550 = vmul.f32 %v422, %v96
  %v551 = vmul.f32 %v424, %v97
  %v552 = vmul.f32 %v427, %v98
  %v553 = vmul.f32 %v429, %v99
  %v554 = vmul.f32 %v432, %v100
  %v555 = vmul.f32 %v434, %v101
  %v556 = vmul.f32 %v437, %v74
  %v557 = vmul.f32 %v439, %v75
  %v558 = vmul.f32 %v442, %v76
  %v559 = vmul.f32 %v444, %v77
  %v560 = vmul.f32 %v447, %v78
  %v561 = vmul.f32 %v449, %v79
  %v562 = vmul.f32 %v452, %v80
  %v563 = vmul.f32 %v454, %v81
  %v564 = vmul.f32 %v457, %v82
  %v565 = vmul.f32 %v459, %v83
  %v566 = vmul.f32 %v462, %v84
  %v567 = vmul.f32 %v464, %v85
  %v568 = vmul.f32 %v467, %v86
  %v569 = vmul.f32 %v469, %v87
  %v570 = vadd.f32 %v542, %v556
  %v571 = vadd.f32 %v543, %v557
  %v572 = vadd.f32 %v544, %v558
  %v573 = vadd.f32 %v545, %v559
  %v574 = vadd.f32 %v546, %v560
  %v575 = vadd.f32 %v547, %v561
  %v576 = vadd.f32 %v548, %v562
  %v577 = vadd.f32 %v549, %v563
  %v578 = vadd.f32 %v550, %v564
  %v579 = vadd.f32 %v551, %v565
  %v580 = vadd.f32 %v552, %v566
  %v581 = vadd.f32 %v553, %v567
  %v582 = vadd.f32 %v554, %v568
  %v583 = vadd.f32 %v555, %v569
  %v584 = vpack.c.bf16 %v570, %v570
  %v585 = vpack.c.bf16 %v571, %v571
  %v586 = vpack.c.bf16 %v572, %v572
  %v587 = vpack.c.bf16 %v573, %v573
  %v588 = vpack.c.bf16 %v574, %v574
  %v589 = vpack.c.bf16 %v575, %v575
  %v590 = vpack.c.bf16 %v576, %v576
  %v591 = vpack.c.bf16 %v577, %v577
  %v592 = vpack.c.bf16 %v578, %v578
  %v593 = vpack.c.bf16 %v579, %v579
  %v594 = vpack.c.bf16 %v580, %v580
  %v595 = vpack.c.bf16 %v581, %v581
  %v596 = vpack.c.bf16 %v582, %v582
  %v597 = vpack.c.bf16 %v583, %v583
  %598 = vst.msk [vmem:[#allocation2 + $0x38] sm:$0xf] %vm527, %v584
  %599 = vst.msk [vmem:[#allocation2 + $0x3c] sm:$0xf] %vm527, %v585
  %600 = vst.msk [vmem:[#allocation2 + $0x40] sm:$0xf] %vm527, %v586
  %601 = vst.msk [vmem:[#allocation2 + $0x44] sm:$0xf] %vm527, %v587
  %602 = vst.msk [vmem:[#allocation2 + $0x48] sm:$0xf] %vm527, %v588
  %603 = vst.msk [vmem:[#allocation2 + $0x4c] sm:$0xf] %vm527, %v589
  %604 = vst.msk [vmem:[#allocation2 + $0x50] sm:$0xf] %vm527, %v590
  %605 = vst.msk [vmem:[#allocation2 + $0x54] sm:$0xf] %vm527, %v591
  %606 = vst.msk [vmem:[#allocation2 + $0x58] sm:$0xf] %vm527, %v592
  %607 = vst.msk [vmem:[#allocation2 + $0x5c] sm:$0xf] %vm527, %v593
  %608 = vst.msk [vmem:[#allocation2 + $0x60] sm:$0xf] %vm527, %v594
  %609 = vst.msk [vmem:[#allocation2 + $0x64] sm:$0xf] %vm527, %v595
  %610 = vst.msk [vmem:[#allocation2 + $0x68] sm:$0xf] %vm527, %v596
  %611 = vst.msk [vmem:[#allocation2 + $0x6c] sm:$0xf] %vm527, %v597
  %v612 = vld [vmem:[#allocation2] sm:$0xf]
  %v613 = vld [vmem:[#allocation2 + $0x4] sm:$0xf]
  %v614 = vld [vmem:[#allocation2 + $0x8] sm:$0xf]
  %v615 = vld [vmem:[#allocation2 + $0xc] sm:$0xf]
  %v616 = vld [vmem:[#allocation2 + $0x10] sm:$0xf]
  %v617 = vld [vmem:[#allocation2 + $0x14] sm:$0xf]
  %v618 = vld [vmem:[#allocation2 + $0x18] sm:$0xf]
  %v619 = vld [vmem:[#allocation2 + $0x1c] sm:$0xf]
  %v620 = vld [vmem:[#allocation2 + $0x20] sm:$0xf]
  %v621 = vld [vmem:[#allocation2 + $0x24] sm:$0xf]
  %v622 = vld [vmem:[#allocation2 + $0x28] sm:$0xf]
  %v623 = vld [vmem:[#allocation2 + $0x2c] sm:$0xf]
  %v624 = vld [vmem:[#allocation2 + $0x30] sm:$0xf]
  %v625 = vld [vmem:[#allocation2 + $0x34] sm:$0xf]
  %v626 = vld [vmem:[#allocation2 + $0x38] sm:$0xf]
  %v627 = vld [vmem:[#allocation2 + $0x3c] sm:$0xf]
  %v628 = vld [vmem:[#allocation2 + $0x40] sm:$0xf]
  %v629 = vld [vmem:[#allocation2 + $0x44] sm:$0xf]
  %v630 = vld [vmem:[#allocation2 + $0x48] sm:$0xf]
  %v631 = vld [vmem:[#allocation2 + $0x4c] sm:$0xf]
  %v632 = vld [vmem:[#allocation2 + $0x50] sm:$0xf]
  %v633 = vld [vmem:[#allocation2 + $0x54] sm:$0xf]
  %v634 = vld [vmem:[#allocation2 + $0x58] sm:$0xf]
  %v635 = vld [vmem:[#allocation2 + $0x5c] sm:$0xf]
  %v636 = vld [vmem:[#allocation2 + $0x60] sm:$0xf]
  %v637 = vld [vmem:[#allocation2 + $0x64] sm:$0xf]
  %v638 = vld [vmem:[#allocation2 + $0x68] sm:$0xf]
  %v639 = vld [vmem:[#allocation2 + $0x6c] sm:$0xf]
  %v665 = vunpack.c.l.b16 %v49
  %v666 = vunpack.c.h.b16 %v49
  %v667 = vunpack.c.l.b16 %v50
  %v668 = vunpack.c.h.b16 %v50
  %v669 = vunpack.c.l.b16 %v51
  %v670 = vunpack.c.h.b16 %v51
  %v671 = vunpack.c.l.b16 %v52
  %v672 = vunpack.c.h.b16 %v52
  %v673 = vunpack.c.l.b16 %v53
  %v674 = vunpack.c.h.b16 %v53
  %v675 = vunpack.c.l.b16 %v54
  %v676 = vunpack.c.h.b16 %v54
  %v677 = vunpack.c.l.b16 %v55
  %v678 = vunpack.c.h.b16 %v55
  %v679 = vunpack.c.l.b16 %v56
  %v680 = vunpack.c.h.b16 %v56
  %v681 = vunpack.c.l.b16 %v57
  %v682 = vunpack.c.h.b16 %v57
  %v683 = vunpack.c.l.b16 %v58
  %v684 = vunpack.c.h.b16 %v58
  %v685 = vunpack.c.l.b16 %v59
  %v686 = vunpack.c.h.b16 %v59
  %v687 = vunpack.c.l.b16 %v60
  %v688 = vunpack.c.h.b16 %v60
  %v689 = vunpack.c.l.b16 %v61
  %v690 = vunpack.c.h.b16 %v61
  %v691 = vunpack.c.l.b16 %v62
  %v692 = vunpack.c.h.b16 %v62
  %v693 = vunpack.c.l.b16 %v63
  %v694 = vunpack.c.h.b16 %v63
  %v695 = vunpack.c.l.b16 %v64
  %v696 = vunpack.c.h.b16 %v64
  %v697 = vunpack.c.l.b16 %v65
  %v698 = vunpack.c.h.b16 %v65
  %v699 = vunpack.c.l.b16 %v66
  %v700 = vunpack.c.h.b16 %v66
  %v701 = vunpack.c.l.b16 %v67
  %v702 = vunpack.c.h.b16 %v67
  %v703 = vunpack.c.l.b16 %v68
  %v704 = vunpack.c.h.b16 %v68
  %v705 = vunpack.c.l.b16 %v69
  %v706 = vunpack.c.h.b16 %v69
  %v707 = vunpack.c.l.b16 %v70
  %v708 = vunpack.c.h.b16 %v70
  %v709 = vunpack.c.l.b16 %v71
  %v710 = vunpack.c.h.b16 %v71
  %v711 = vunpack.c.l.b16 %v72
  %v712 = vunpack.c.h.b16 %v72
  %v713 = vunpack.c.l.b16 %v73
  %v714 = vunpack.c.h.b16 %v73
  %v715 = vpack.c.b16 %v667, %v665
  %v716 = vpack.c.b16 %v668, %v666
  %v717 = vpack.c.b16 %v671, %v669
  %v718 = vpack.c.b16 %v672, %v670
  %v719 = vpack.c.b16 %v675, %v673
  %v720 = vpack.c.b16 %v676, %v674
  %v721 = vpack.c.b16 %v679, %v677
  %v722 = vpack.c.b16 %v680, %v678
  %v723 = vpack.c.b16 %v683, %v681
  %v724 = vpack.c.b16 %v684, %v682
  %v725 = vpack.c.b16 %v687, %v685
  %v726 = vpack.c.b16 %v688, %v686
  %v727 = vpack.c.b16 %v691, %v689
  %v728 = vpack.c.b16 %v692, %v690
  %v729 = vpack.c.b16 %v695, %v693
  %v730 = vpack.c.b16 %v696, %v694
  %v731 = vpack.c.b16 %v699, %v697
  %v732 = vpack.c.b16 %v700, %v698
  %v733 = vpack.c.b16 %v703, %v701
  %v734 = vpack.c.b16 %v704, %v702
  %v735 = vpack.c.b16 %v707, %v705
  %v736 = vpack.c.b16 %v708, %v706
  %v737 = vpack.c.b16 %v711, %v709
  %v738 = vpack.c.b16 %v712, %v710
  %v739 = vpack.c.b16 %v713, %v713
  %v740 = vpack.c.b16 %v714, %v714
  %v782 = vunpack.c.l.b16 %v612
  %v783 = vunpack.c.l.b16 %v613
  %v784 = vunpack.c.l.b16 %v614
  %v785 = vunpack.c.l.b16 %v615
  %v786 = vunpack.c.l.b16 %v616
  %v787 = vunpack.c.l.b16 %v617
  %v788 = vunpack.c.l.b16 %v618
  %v789 = vunpack.c.l.b16 %v619
  %v790 = vunpack.c.l.b16 %v620
  %v791 = vunpack.c.l.b16 %v621
  %v792 = vunpack.c.l.b16 %v622
  %v793 = vunpack.c.l.b16 %v623
  %v794 = vunpack.c.l.b16 %v624
  %v795 = vunpack.c.l.b16 %v625
  %v796 = vunpack.c.l.b16 %v626
  %v797 = vunpack.c.l.b16 %v627
  %v798 = vunpack.c.l.b16 %v628
  %v799 = vunpack.c.l.b16 %v629
  %v800 = vunpack.c.l.b16 %v630
  %v801 = vunpack.c.l.b16 %v631
  %v802 = vunpack.c.l.b16 %v632
  %v803 = vunpack.c.l.b16 %v633
  %v804 = vunpack.c.l.b16 %v634
  %v805 = vunpack.c.l.b16 %v635
  %v806 = vunpack.c.l.b16 %v636
  %v807 = vunpack.c.l.b16 %v637
  %v808 = vunpack.c.l.b16 %v638
  %v809 = vunpack.c.l.b16 %v639
  %v810 = vpack.c.b16 %v783, %v782
  %v811 = vpack.c.b16 %v785, %v784
  %v812 = vpack.c.b16 %v787, %v786
  %v813 = vpack.c.b16 %v789, %v788
  %v814 = vpack.c.b16 %v791, %v790
  %v815 = vpack.c.b16 %v793, %v792
  %v816 = vpack.c.b16 %v795, %v794
  %v817 = vpack.c.b16 %v797, %v796
  %v818 = vpack.c.b16 %v799, %v798
  %v819 = vpack.c.b16 %v801, %v800
  %v820 = vpack.c.b16 %v803, %v802
  %v821 = vpack.c.b16 %v805, %v804
  %v822 = vpack.c.b16 %v807, %v806
  %v823 = vpack.c.b16 %v809, %v808
  %vm838 = vcmask 785408
  %v840 = vsel %vm838, %v716, 0
  %v843 = vsel %vm838, %v718, 0
  %v846 = vsel %vm838, %v720, 0
  %v849 = vsel %vm838, %v722, 0
  %v852 = vsel %vm838, %v724, 0
  %v855 = vsel %vm838, %v726, 0
  %v858 = vsel %vm838, %v728, 0
  %v861 = vsel %vm838, %v730, 0
  %v864 = vsel %vm838, %v732, 0
  %v867 = vsel %vm838, %v734, 0
  %v870 = vsel %vm838, %v736, 0
  %v873 = vsel %vm838, %v738, 0
  %v876 = vsel %vm838, %v740, 0
  %878 = vmatpush.bf16.msra.mxu0 %v817
  %879 = vmatpush.bf16.msra.mxu0 %v816
  %880 = vmatpush.bf16.msra.mxu0 %v815
  %881 = vmatpush.bf16.msra.mxu0 %v814
  %882 = vmatpush.bf16.msra.mxu0 %v813
  %883 = vmatpush.bf16.msra.mxu0 %v812
  %884 = vmatpush.bf16.msra.mxu0 %v811
  %885 = vmatpush.bf16.msra.mxu0 %v810
  %886 = vmatmul.bf16.gmra.mxu0 %v715
  %v887 = vpop.f32.mrf.mxu0
  %v888 = vadd.f32 0.0, %v887
  %v889 = vpop.f32.mrf.mxu0
  %v890 = vadd.f32 0.0, %v889
  %891 = vmatmul.bf16.gmra.mxu0 %v717
  %v892 = vpop.f32.mrf.mxu0
  %v893 = vadd.f32 0.0, %v892
  %v894 = vpop.f32.mrf.mxu0
  %v895 = vadd.f32 0.0, %v894
  %896 = vmatmul.bf16.gmra.mxu0 %v719
  %v897 = vpop.f32.mrf.mxu0
  %v898 = vadd.f32 0.0, %v897
  %v899 = vpop.f32.mrf.mxu0
  %v900 = vadd.f32 0.0, %v899
  %901 = vmatmul.bf16.gmra.mxu0 %v721
  %v902 = vpop.f32.mrf.mxu0
  %v903 = vadd.f32 0.0, %v902
  %v904 = vpop.f32.mrf.mxu0
  %v905 = vadd.f32 0.0, %v904
  %906 = vmatmul.bf16.gmra.mxu0 %v723
  %v907 = vpop.f32.mrf.mxu0
  %v908 = vadd.f32 0.0, %v907
  %v909 = vpop.f32.mrf.mxu0
  %v910 = vadd.f32 0.0, %v909
  %911 = vmatmul.bf16.gmra.mxu0 %v725
  %v912 = vpop.f32.mrf.mxu0
  %v913 = vadd.f32 0.0, %v912
  %v914 = vpop.f32.mrf.mxu0
  %v915 = vadd.f32 0.0, %v914
  %916 = vmatmul.bf16.gmra.mxu0 %v727
  %v917 = vpop.f32.mrf.mxu0
  %v918 = vadd.f32 0.0, %v917
  %v919 = vpop.f32.mrf.mxu0
  %v920 = vadd.f32 0.0, %v919
  %921 = vmatmul.bf16.gmra.mxu0 %v729
  %v922 = vpop.f32.mrf.mxu0
  %v923 = vadd.f32 0.0, %v922
  %v924 = vpop.f32.mrf.mxu0
  %v925 = vadd.f32 0.0, %v924
  %926 = vmatmul.bf16.gmra.mxu0 %v731
  %v927 = vpop.f32.mrf.mxu0
  %v928 = vadd.f32 0.0, %v927
  %v929 = vpop.f32.mrf.mxu0
  %v930 = vadd.f32 0.0, %v929
  %931 = vmatmul.bf16.gmra.mxu0 %v733
  %v932 = vpop.f32.mrf.mxu0
  %v933 = vadd.f32 0.0, %v932
  %v934 = vpop.f32.mrf.mxu0
  %v935 = vadd.f32 0.0, %v934
  %936 = vmatmul.bf16.gmra.mxu0 %v735
  %v937 = vpop.f32.mrf.mxu0
  %v938 = vadd.f32 0.0, %v937
  %v939 = vpop.f32.mrf.mxu0
  %v940 = vadd.f32 0.0, %v939
  %941 = vmatmul.bf16.gmra.mxu0 %v737
  %v942 = vpop.f32.mrf.mxu0
  %v943 = vadd.f32 0.0, %v942
  %v944 = vpop.f32.mrf.mxu0
  %v945 = vadd.f32 0.0, %v944
  %946 = vmatmul.bf16.gmra.mxu0 %v739
  %v947 = vpop.f32.mrf.mxu0
  %v948 = vadd.f32 0.0, %v947
  %v949 = vpop.f32.mrf.mxu0
  %950 = vdwg.mxu0
  %951 = vmatpush.bf16.msra.mxu0 0
  %952 = vmatpush.bf16.msra.mxu0 0
  %953 = vmatpush.bf16.msra.mxu0 %v823
  %954 = vmatpush.bf16.msra.mxu0 %v822
  %955 = vmatpush.bf16.msra.mxu0 %v821
  %956 = vmatpush.bf16.msra.mxu0 %v820
  %957 = vmatpush.bf16.msra.mxu0 %v819
  %958 = vmatpush.bf16.msra.mxu0 %v818
  %959 = vmatmul.bf16.gmra.mxu0 %v840
  %v960 = vpop.f32.mrf.mxu0
  %v961 = vadd.f32 %v888, %v960
  %v962 = vpop.f32.mrf.mxu0
  %v963 = vadd.f32 %v890, %v962
  %964 = vmatmul.bf16.gmra.mxu0 %v843
  %v965 = vpop.f32.mrf.mxu0
  %v966 = vadd.f32 %v893, %v965
  %v967 = vpop.f32.mrf.mxu0
  %v968 = vadd.f32 %v895, %v967
  %969 = vmatmul.bf16.gmra.mxu0 %v846
  %v970 = vpop.f32.mrf.mxu0
  %v971 = vadd.f32 %v898, %v970
  %v972 = vpop.f32.mrf.mxu0
  %v973 = vadd.f32 %v900, %v972
  %974 = vmatmul.bf16.gmra.mxu0 %v849
  %v975 = vpop.f32.mrf.mxu0
  %v976 = vadd.f32 %v903, %v975
  %v977 = vpop.f32.mrf.mxu0
  %v978 = vadd.f32 %v905, %v977
  %979 = vmatmul.bf16.gmra.mxu0 %v852
  %v980 = vpop.f32.mrf.mxu0
  %v981 = vadd.f32 %v908, %v980
  %v982 = vpop.f32.mrf.mxu0
  %v983 = vadd.f32 %v910, %v982
  %984 = vmatmul.bf16.gmra.mxu0 %v855
  %v985 = vpop.f32.mrf.mxu0
  %v986 = vadd.f32 %v913, %v985
  %v987 = vpop.f32.mrf.mxu0
  %v988 = vadd.f32 %v915, %v987
  %989 = vmatmul.bf16.gmra.mxu0 %v858
  %v990 = vpop.f32.mrf.mxu0
  %v991 = vadd.f32 %v918, %v990
  %v992 = vpop.f32.mrf.mxu0
  %v993 = vadd.f32 %v920, %v992
  %994 = vmatmul.bf16.gmra.mxu0 %v861
  %v995 = vpop.f32.mrf.mxu0
  %v996 = vadd.f32 %v923, %v995
  %v997 = vpop.f32.mrf.mxu0
  %v998 = vadd.f32 %v925, %v997
  %999 = vmatmul.bf16.gmra.mxu0 %v864
  %v1000 = vpop.f32.mrf.mxu0
  %v1001 = vadd.f32 %v928, %v1000
  %v1002 = vpop.f32.mrf.mxu0
  %v1003 = vadd.f32 %v930, %v1002
  %1004 = vmatmul.bf16.gmra.mxu0 %v867
  %v1005 = vpop.f32.mrf.mxu0
  %v1006 = vadd.f32 %v933, %v1005
  %v1007 = vpop.f32.mrf.mxu0
  %v1008 = vadd.f32 %v935, %v1007
  %1009 = vmatmul.bf16.gmra.mxu0 %v870
  %v1010 = vpop.f32.mrf.mxu0
  %v1011 = vadd.f32 %v938, %v1010
  %v1012 = vpop.f32.mrf.mxu0
  %v1013 = vadd.f32 %v940, %v1012
  %1014 = vmatmul.bf16.gmra.mxu0 %v873
  %v1015 = vpop.f32.mrf.mxu0
  %v1016 = vadd.f32 %v943, %v1015
  %v1017 = vpop.f32.mrf.mxu0
  %v1018 = vadd.f32 %v945, %v1017
  %1019 = vmatmul.bf16.gmra.mxu0 %v876
  %v1020 = vpop.f32.mrf.mxu0
  %v1021 = vadd.f32 %v948, %v1020
  %v1022 = vpop.f32.mrf.mxu0
  %1023 = vdwg.mxu0
  %vm1024 = vcmask 523264
  %1025 = vst.msk [vmem:[%s5] sm:$0xff] %vm1024, %v961
  %1026 = vst.msk [vmem:[%s5 + $0x8] sm:$0xff] %vm1024, %v963
  %1027 = vst.msk [vmem:[%s5 + $0x10] sm:$0xff] %vm1024, %v966
  %1028 = vst.msk [vmem:[%s5 + $0x18] sm:$0xff] %vm1024, %v968
  %1029 = vst.msk [vmem:[%s5 + $0x20] sm:$0xff] %vm1024, %v971
  %1030 = vst.msk [vmem:[%s5 + $0x28] sm:$0xff] %vm1024, %v973
  %1031 = vst.msk [vmem:[%s5 + $0x30] sm:$0xff] %vm1024, %v976
  %1032 = vst.msk [vmem:[%s5 + $0x38] sm:$0xff] %vm1024, %v978
  %1033 = vst.msk [vmem:[%s5 + $0x40] sm:$0xff] %vm1024, %v981
  %1034 = vst.msk [vmem:[%s5 + $0x48] sm:$0xff] %vm1024, %v983
  %1035 = vst.msk [vmem:[%s5 + $0x50] sm:$0xff] %vm1024, %v986
  %1036 = vst.msk [vmem:[%s5 + $0x58] sm:$0xff] %vm1024, %v988
  %1037 = vst.msk [vmem:[%s5 + $0x60] sm:$0xff] %vm1024, %v991
  %1038 = vst.msk [vmem:[%s5 + $0x68] sm:$0xff] %vm1024, %v993
  %1039 = vst.msk [vmem:[%s5 + $0x70] sm:$0xff] %vm1024, %v996
  %1040 = vst.msk [vmem:[%s5 + $0x78] sm:$0xff] %vm1024, %v998
  %1041 = vst.msk [vmem:[%s5 + $0x80] sm:$0xff] %vm1024, %v1001
  %1042 = vst.msk [vmem:[%s5 + $0x88] sm:$0xff] %vm1024, %v1003
  %1043 = vst.msk [vmem:[%s5 + $0x90] sm:$0xff] %vm1024, %v1006
  %1044 = vst.msk [vmem:[%s5 + $0x98] sm:$0xff] %vm1024, %v1008
  %1045 = vst.msk [vmem:[%s5 + $0xa0] sm:$0xff] %vm1024, %v1011
  %1046 = vst.msk [vmem:[%s5 + $0xa8] sm:$0xff] %vm1024, %v1013
  %1047 = vst.msk [vmem:[%s5 + $0xb0] sm:$0xff] %vm1024, %v1016
  %1048 = vst.msk [vmem:[%s5 + $0xb8] sm:$0xff] %vm1024, %v1018
  %1049 = vst.msk [vmem:[%s5 + $0xc0] sm:$0xf] %vm527, %v1021
  %s1050 = scalar_lea.vmem %s0, 200
  %v1051 = vld [vmem:[%s1050] sm:$0xff]
  %v1052 = vld [vmem:[%s1050 + $0x8] sm:$0xff]
  %v1053 = vld [vmem:[%s1050 + $0x10] sm:$0xff]
  %v1054 = vld [vmem:[%s1050 + $0x18] sm:$0xff]
  %v1055 = vld [vmem:[%s1050 + $0x20] sm:$0xff]
  %v1056 = vld [vmem:[%s1050 + $0x28] sm:$0xff]
  %v1057 = vld [vmem:[%s1050 + $0x30] sm:$0xff]
  %v1058 = vld [vmem:[%s1050 + $0x38] sm:$0xff]
  %v1059 = vld [vmem:[%s1050 + $0x40] sm:$0xff]
  %v1060 = vld [vmem:[%s1050 + $0x48] sm:$0xff]
  %v1061 = vld [vmem:[%s1050 + $0x50] sm:$0xff]
  %v1062 = vld [vmem:[%s1050 + $0x58] sm:$0xff]
  %v1063 = vld [vmem:[%s1050 + $0x60] sm:$0xff]
  %v1064 = vld [vmem:[%s1050 + $0x68] sm:$0xff]
  %v1065 = vld [vmem:[%s1050 + $0x70] sm:$0xff]
  %v1066 = vld [vmem:[%s1050 + $0x78] sm:$0xff]
  %v1067 = vld [vmem:[%s1050 + $0x80] sm:$0xff]
  %v1068 = vld [vmem:[%s1050 + $0x88] sm:$0xff]
  %v1069 = vld [vmem:[%s1050 + $0x90] sm:$0xff]
  %v1070 = vld [vmem:[%s1050 + $0x98] sm:$0xff]
  %v1071 = vld [vmem:[%s1050 + $0xa0] sm:$0xff]
  %v1072 = vld [vmem:[%s1050 + $0xa8] sm:$0xff]
  %v1073 = vld [vmem:[%s1050 + $0xb0] sm:$0xff]
  %v1074 = vld [vmem:[%s1050 + $0xb8] sm:$0xff]
  %v1075 = vld [vmem:[%s1050 + $0xc0] sm:$0xf]
  %v1076 = vpack.c.bf16 %v1052, %v1051
  %v1077 = vpack.c.bf16 %v1054, %v1053
  %v1078 = vpack.c.bf16 %v1056, %v1055
  %v1079 = vpack.c.bf16 %v1058, %v1057
  %v1080 = vpack.c.bf16 %v1060, %v1059
  %v1081 = vpack.c.bf16 %v1062, %v1061
  %v1082 = vpack.c.bf16 %v1064, %v1063
  %v1083 = vpack.c.bf16 %v1066, %v1065
  %v1084 = vpack.c.bf16 %v1068, %v1067
  %v1085 = vpack.c.bf16 %v1070, %v1069
  %v1086 = vpack.c.bf16 %v1072, %v1071
  %v1087 = vpack.c.bf16 %v1074, %v1073
  %v1088 = vpack.c.bf16 %v1075, %v1075
  %v1090 = vsel %vm309, %v1088, 0
  %1092 = vmatpush.bf16.msra.mxu0 %v1083
  %1093 = vmatpush.bf16.msra.mxu0 %v1082
  %1094 = vmatpush.bf16.msra.mxu0 %v1081
  %1095 = vmatpush.bf16.msra.mxu0 %v1080
  %1096 = vmatpush.bf16.msra.mxu0 %v1079
  %1097 = vmatpush.bf16.msra.mxu0 %v1078
  %1098 = vmatpush.bf16.msra.mxu0 %v1077
  %1099 = vmatpush.bf16.msra.mxu0 %v1076
  %1100 = vmatmul.bf16.gmra.mxu0 %v224
  %v1101 = vpop.f32.mrf.mxu0
  %v1102 = vadd.f32 0.0, %v1101
  %v1103 = vpop.f32.mrf.mxu0
  %v1104 = vadd.f32 0.0, %v1103
  %1105 = vmatmul.bf16.gmra.mxu0 %v226
  %v1106 = vpop.f32.mrf.mxu0
  %v1107 = vadd.f32 0.0, %v1106
  %v1108 = vpop.f32.mrf.mxu0
  %v1109 = vadd.f32 0.0, %v1108
  %1110 = vmatmul.bf16.gmra.mxu0 %v228
  %v1111 = vpop.f32.mrf.mxu0
  %v1112 = vadd.f32 0.0, %v1111
  %v1113 = vpop.f32.mrf.mxu0
  %v1114 = vadd.f32 0.0, %v1113
  %1115 = vmatmul.bf16.gmra.mxu0 %v230
  %v1116 = vpop.f32.mrf.mxu0
  %v1117 = vadd.f32 0.0, %v1116
  %v1118 = vpop.f32.mrf.mxu0
  %v1119 = vadd.f32 0.0, %v1118
  %1120 = vmatmul.bf16.gmra.mxu0 %v232
  %v1121 = vpop.f32.mrf.mxu0
  %v1122 = vadd.f32 0.0, %v1121
  %v1123 = vpop.f32.mrf.mxu0
  %v1124 = vadd.f32 0.0, %v1123
  %1125 = vmatmul.bf16.gmra.mxu0 %v234
  %v1126 = vpop.f32.mrf.mxu0
  %v1127 = vadd.f32 0.0, %v1126
  %v1128 = vpop.f32.mrf.mxu0
  %v1129 = vadd.f32 0.0, %v1128
  %1130 = vmatmul.bf16.gmra.mxu0 %v236
  %v1131 = vpop.f32.mrf.mxu0
  %v1132 = vadd.f32 0.0, %v1131
  %v1133 = vpop.f32.mrf.mxu0
  %v1134 = vadd.f32 0.0, %v1133
  %1135 = vmatmul.bf16.gmra.mxu0 %v238
  %v1136 = vpop.f32.mrf.mxu0
  %v1137 = vadd.f32 0.0, %v1136
  %v1138 = vpop.f32.mrf.mxu0
  %v1139 = vadd.f32 0.0, %v1138
  %1140 = vmatmul.bf16.gmra.mxu0 %v240
  %v1141 = vpop.f32.mrf.mxu0
  %v1142 = vadd.f32 0.0, %v1141
  %v1143 = vpop.f32.mrf.mxu0
  %v1144 = vadd.f32 0.0, %v1143
  %1145 = vmatmul.bf16.gmra.mxu0 %v242
  %v1146 = vpop.f32.mrf.mxu0
  %v1147 = vadd.f32 0.0, %v1146
  %v1148 = vpop.f32.mrf.mxu0
  %v1149 = vadd.f32 0.0, %v1148
  %1150 = vmatmul.bf16.gmra.mxu0 %v244
  %v1151 = vpop.f32.mrf.mxu0
  %v1152 = vadd.f32 0.0, %v1151
  %v1153 = vpop.f32.mrf.mxu0
  %v1154 = vadd.f32 0.0, %v1153
  %1155 = vmatmul.bf16.gmra.mxu0 %v246
  %v1156 = vpop.f32.mrf.mxu0
  %v1157 = vadd.f32 0.0, %v1156
  %v1158 = vpop.f32.mrf.mxu0
  %v1159 = vadd.f32 0.0, %v1158
  %1160 = vmatmul.bf16.gmra.mxu0 %v248
  %v1161 = vpop.f32.mrf.mxu0
  %v1162 = vadd.f32 0.0, %v1161
  %v1163 = vpop.f32.mrf.mxu0
  %v1164 = vadd.f32 0.0, %v1163
  %1165 = vmatmul.bf16.gmra.mxu0 %v250
  %v1166 = vpop.f32.mrf.mxu0
  %v1167 = vadd.f32 0.0, %v1166
  %v1168 = vpop.f32.mrf.mxu0
  %v1169 = vadd.f32 0.0, %v1168
  %1170 = vdwg.mxu0
  %1171 = vmatpush.bf16.msra.mxu0 0
  %1172 = vmatpush.bf16.msra.mxu0 0
  %1173 = vmatpush.bf16.msra.mxu0 0
  %1174 = vmatpush.bf16.msra.mxu0 %v1090
  %1175 = vmatpush.bf16.msra.mxu0 %v1087
  %1176 = vmatpush.bf16.msra.mxu0 %v1086
  %1177 = vmatpush.bf16.msra.mxu0 %v1085
  %1178 = vmatpush.bf16.msra.mxu0 %v1084
  %1179 = vmatmul.bf16.gmra.mxu0 %v268
  %v1180 = vpop.f32.mrf.mxu0
  %v1181 = vadd.f32 %v1102, %v1180
  %v1182 = vpop.f32.mrf.mxu0
  %v1183 = vadd.f32 %v1104, %v1182
  %1184 = vmatmul.bf16.gmra.mxu0 %v271
  %v1185 = vpop.f32.mrf.mxu0
  %v1186 = vadd.f32 %v1107, %v1185
  %v1187 = vpop.f32.mrf.mxu0
  %v1188 = vadd.f32 %v1109, %v1187
  %1189 = vmatmul.bf16.gmra.mxu0 %v274
  %v1190 = vpop.f32.mrf.mxu0
  %v1191 = vadd.f32 %v1112, %v1190
  %v1192 = vpop.f32.mrf.mxu0
  %v1193 = vadd.f32 %v1114, %v1192
  %1194 = vmatmul.bf16.gmra.mxu0 %v277
  %v1195 = vpop.f32.mrf.mxu0
  %v1196 = vadd.f32 %v1117, %v1195
  %v1197 = vpop.f32.mrf.mxu0
  %v1198 = vadd.f32 %v1119, %v1197
  %1199 = vmatmul.bf16.gmra.mxu0 %v280
  %v1200 = vpop.f32.mrf.mxu0
  %v1201 = vadd.f32 %v1122, %v1200
  %v1202 = vpop.f32.mrf.mxu0
  %v1203 = vadd.f32 %v1124, %v1202
  %1204 = vmatmul.bf16.gmra.mxu0 %v283
  %v1205 = vpop.f32.mrf.mxu0
  %v1206 = vadd.f32 %v1127, %v1205
  %v1207 = vpop.f32.mrf.mxu0
  %v1208 = vadd.f32 %v1129, %v1207
  %1209 = vmatmul.bf16.gmra.mxu0 %v286
  %v1210 = vpop.f32.mrf.mxu0
  %v1211 = vadd.f32 %v1132, %v1210
  %v1212 = vpop.f32.mrf.mxu0
  %v1213 = vadd.f32 %v1134, %v1212
  %1214 = vmatmul.bf16.gmra.mxu0 %v289
  %v1215 = vpop.f32.mrf.mxu0
  %v1216 = vadd.f32 %v1137, %v1215
  %v1217 = vpop.f32.mrf.mxu0
  %v1218 = vadd.f32 %v1139, %v1217
  %1219 = vmatmul.bf16.gmra.mxu0 %v292
  %v1220 = vpop.f32.mrf.mxu0
  %v1221 = vadd.f32 %v1142, %v1220
  %v1222 = vpop.f32.mrf.mxu0
  %v1223 = vadd.f32 %v1144, %v1222
  %1224 = vmatmul.bf16.gmra.mxu0 %v295
  %v1225 = vpop.f32.mrf.mxu0
  %v1226 = vadd.f32 %v1147, %v1225
  %v1227 = vpop.f32.mrf.mxu0
  %v1228 = vadd.f32 %v1149, %v1227
  %1229 = vmatmul.bf16.gmra.mxu0 %v298
  %v1230 = vpop.f32.mrf.mxu0
  %v1231 = vadd.f32 %v1152, %v1230
  %v1232 = vpop.f32.mrf.mxu0
  %v1233 = vadd.f32 %v1154, %v1232
  %1234 = vmatmul.bf16.gmra.mxu0 %v301
  %v1235 = vpop.f32.mrf.mxu0
  %v1236 = vadd.f32 %v1157, %v1235
  %v1237 = vpop.f32.mrf.mxu0
  %v1238 = vadd.f32 %v1159, %v1237
  %1239 = vmatmul.bf16.gmra.mxu0 %v304
  %v1240 = vpop.f32.mrf.mxu0
  %v1241 = vadd.f32 %v1162, %v1240
  %v1242 = vpop.f32.mrf.mxu0
  %v1243 = vadd.f32 %v1164, %v1242
  %1244 = vmatmul.bf16.gmra.mxu0 %v307
  %v1245 = vpop.f32.mrf.mxu0
  %v1246 = vadd.f32 %v1167, %v1245
  %v1247 = vpop.f32.mrf.mxu0
  %v1248 = vadd.f32 %v1169, %v1247
  %1249 = vdwg.mxu0
  %v1250 = vmul.f32 %v1181, %v74
  %v1251 = vmul.f32 %v1183, %v75
  %v1252 = vmul.f32 %v1186, %v76
  %v1253 = vmul.f32 %v1188, %v77
  %v1254 = vmul.f32 %v1191, %v78
  %v1255 = vmul.f32 %v1193, %v79
  %v1256 = vmul.f32 %v1196, %v80
  %v1257 = vmul.f32 %v1198, %v81
  %v1258 = vmul.f32 %v1201, %v82
  %v1259 = vmul.f32 %v1203, %v83
  %v1260 = vmul.f32 %v1206, %v84
  %v1261 = vmul.f32 %v1208, %v85
  %v1262 = vmul.f32 %v1211, %v86
  %v1263 = vmul.f32 %v1213, %v87
  %v1264 = vmul.f32 %v1216, %v88
  %v1265 = vmul.f32 %v1218, %v89
  %v1266 = vmul.f32 %v1221, %v90
  %v1267 = vmul.f32 %v1223, %v91
  %v1268 = vmul.f32 %v1226, %v92
  %v1269 = vmul.f32 %v1228, %v93
  %v1270 = vmul.f32 %v1231, %v94
  %v1271 = vmul.f32 %v1233, %v95
  %v1272 = vmul.f32 %v1236, %v96
  %v1273 = vmul.f32 %v1238, %v97
  %v1274 = vmul.f32 %v1241, %v98
  %v1275 = vmul.f32 %v1243, %v99
  %v1276 = vmul.f32 %v1246, %v100
  %v1277 = vmul.f32 %v1248, %v101
  %v1278 = vsub.f32 %v1250, %v1264
  %v1279 = vsub.f32 %v1251, %v1265
  %v1280 = vsub.f32 %v1252, %v1266
  %v1281 = vsub.f32 %v1253, %v1267
  %v1282 = vsub.f32 %v1254, %v1268
  %v1283 = vsub.f32 %v1255, %v1269
  %v1284 = vsub.f32 %v1256, %v1270
  %v1285 = vsub.f32 %v1257, %v1271
  %v1286 = vsub.f32 %v1258, %v1272
  %v1287 = vsub.f32 %v1259, %v1273
  %v1288 = vsub.f32 %v1260, %v1274
  %v1289 = vsub.f32 %v1261, %v1275
  %v1290 = vsub.f32 %v1262, %v1276
  %v1291 = vsub.f32 %v1263, %v1277
  %v1292 = vpack.c.bf16 %v1278, %v1278
  %v1293 = vpack.c.bf16 %v1279, %v1279
  %v1294 = vpack.c.bf16 %v1280, %v1280
  %v1295 = vpack.c.bf16 %v1281, %v1281
  %v1296 = vpack.c.bf16 %v1282, %v1282
  %v1297 = vpack.c.bf16 %v1283, %v1283
  %v1298 = vpack.c.bf16 %v1284, %v1284
  %v1299 = vpack.c.bf16 %v1285, %v1285
  %v1300 = vpack.c.bf16 %v1286, %v1286
  %v1301 = vpack.c.bf16 %v1287, %v1287
  %v1302 = vpack.c.bf16 %v1288, %v1288
  %v1303 = vpack.c.bf16 %v1289, %v1289
  %v1304 = vpack.c.bf16 %v1290, %v1290
  %v1305 = vpack.c.bf16 %v1291, %v1291
  %1306 = vst.msk [vmem:[#allocation2] sm:$0xf] %vm527, %v1292
  %1307 = vst.msk [vmem:[#allocation2 + $0x4] sm:$0xf] %vm527, %v1293
  %1308 = vst.msk [vmem:[#allocation2 + $0x8] sm:$0xf] %vm527, %v1294
  %1309 = vst.msk [vmem:[#allocation2 + $0xc] sm:$0xf] %vm527, %v1295
  %1310 = vst.msk [vmem:[#allocation2 + $0x10] sm:$0xf] %vm527, %v1296
  %1311 = vst.msk [vmem:[#allocation2 + $0x14] sm:$0xf] %vm527, %v1297
  %1312 = vst.msk [vmem:[#allocation2 + $0x18] sm:$0xf] %vm527, %v1298
  %1313 = vst.msk [vmem:[#allocation2 + $0x1c] sm:$0xf] %vm527, %v1299
  %1314 = vst.msk [vmem:[#allocation2 + $0x20] sm:$0xf] %vm527, %v1300
  %1315 = vst.msk [vmem:[#allocation2 + $0x24] sm:$0xf] %vm527, %v1301
  %1316 = vst.msk [vmem:[#allocation2 + $0x28] sm:$0xf] %vm527, %v1302
  %1317 = vst.msk [vmem:[#allocation2 + $0x2c] sm:$0xf] %vm527, %v1303
  %1318 = vst.msk [vmem:[#allocation2 + $0x30] sm:$0xf] %vm527, %v1304
  %1319 = vst.msk [vmem:[#allocation2 + $0x34] sm:$0xf] %vm527, %v1305
  %v1320 = vmul.f32 %v1181, %v88
  %v1321 = vmul.f32 %v1183, %v89
  %v1322 = vmul.f32 %v1186, %v90
  %v1323 = vmul.f32 %v1188, %v91
  %v1324 = vmul.f32 %v1191, %v92
  %v1325 = vmul.f32 %v1193, %v93
  %v1326 = vmul.f32 %v1196, %v94
  %v1327 = vmul.f32 %v1198, %v95
  %v1328 = vmul.f32 %v1201, %v96
  %v1329 = vmul.f32 %v1203, %v97
  %v1330 = vmul.f32 %v1206, %v98
  %v1331 = vmul.f32 %v1208, %v99
  %v1332 = vmul.f32 %v1211, %v100
  %v1333 = vmul.f32 %v1213, %v101
  %v1334 = vmul.f32 %v1216, %v74
  %v1335 = vmul.f32 %v1218, %v75
  %v1336 = vmul.f32 %v1221, %v76
  %v1337 = vmul.f32 %v1223, %v77
  %v1338 = vmul.f32 %v1226, %v78
  %v1339 = vmul.f32 %v1228, %v79
  %v1340 = vmul.f32 %v1231, %v80
  %v1341 = vmul.f32 %v1233, %v81
  %v1342 = vmul.f32 %v1236, %v82
  %v1343 = vmul.f32 %v1238, %v83
  %v1344 = vmul.f32 %v1241, %v84
  %v1345 = vmul.f32 %v1243, %v85
  %v1346 = vmul.f32 %v1246, %v86
  %v1347 = vmul.f32 %v1248, %v87
  %v1348 = vadd.f32 %v1320, %v1334
  %v1349 = vadd.f32 %v1321, %v1335
  %v1350 = vadd.f32 %v1322, %v1336
  %v1351 = vadd.f32 %v1323, %v1337
  %v1352 = vadd.f32 %v1324, %v1338
  %v1353 = vadd.f32 %v1325, %v1339
  %v1354 = vadd.f32 %v1326, %v1340
  %v1355 = vadd.f32 %v1327, %v1341
  %v1356 = vadd.f32 %v1328, %v1342
  %v1357 = vadd.f32 %v1329, %v1343
  %v1358 = vadd.f32 %v1330, %v1344
  %v1359 = vadd.f32 %v1331, %v1345
  %v1360 = vadd.f32 %v1332, %v1346
  %v1361 = vadd.f32 %v1333, %v1347
  %v1362 = vpack.c.bf16 %v1348, %v1348
  %v1363 = vpack.c.bf16 %v1349, %v1349
  %v1364 = vpack.c.bf16 %v1350, %v1350
  %v1365 = vpack.c.bf16 %v1351, %v1351
  %v1366 = vpack.c.bf16 %v1352, %v1352
  %v1367 = vpack.c.bf16 %v1353, %v1353
  %v1368 = vpack.c.bf16 %v1354, %v1354
  %v1369 = vpack.c.bf16 %v1355, %v1355
  %v1370 = vpack.c.bf16 %v1356, %v1356
  %v1371 = vpack.c.bf16 %v1357, %v1357
  %v1372 = vpack.c.bf16 %v1358, %v1358
  %v1373 = vpack.c.bf16 %v1359, %v1359
  %v1374 = vpack.c.bf16 %v1360, %v1360
  %v1375 = vpack.c.bf16 %v1361, %v1361
  %1376 = vst.msk [vmem:[#allocation2 + $0x38] sm:$0xf] %vm527, %v1362
  %1377 = vst.msk [vmem:[#allocation2 + $0x3c] sm:$0xf] %vm527, %v1363
  %1378 = vst.msk [vmem:[#allocation2 + $0x40] sm:$0xf] %vm527, %v1364
  %1379 = vst.msk [vmem:[#allocation2 + $0x44] sm:$0xf] %vm527, %v1365
  %1380 = vst.msk [vmem:[#allocation2 + $0x48] sm:$0xf] %vm527, %v1366
  %1381 = vst.msk [vmem:[#allocation2 + $0x4c] sm:$0xf] %vm527, %v1367
  %1382 = vst.msk [vmem:[#allocation2 + $0x50] sm:$0xf] %vm527, %v1368
  %1383 = vst.msk [vmem:[#allocation2 + $0x54] sm:$0xf] %vm527, %v1369
  %1384 = vst.msk [vmem:[#allocation2 + $0x58] sm:$0xf] %vm527, %v1370
  %1385 = vst.msk [vmem:[#allocation2 + $0x5c] sm:$0xf] %vm527, %v1371
  %1386 = vst.msk [vmem:[#allocation2 + $0x60] sm:$0xf] %vm527, %v1372
  %1387 = vst.msk [vmem:[#allocation2 + $0x64] sm:$0xf] %vm527, %v1373
  %1388 = vst.msk [vmem:[#allocation2 + $0x68] sm:$0xf] %vm527, %v1374
  %1389 = vst.msk [vmem:[#allocation2 + $0x6c] sm:$0xf] %vm527, %v1375
  %v1390 = vld [vmem:[#allocation2] sm:$0xf]
  %v1391 = vld [vmem:[#allocation2 + $0x4] sm:$0xf]
  %v1392 = vld [vmem:[#allocation2 + $0x8] sm:$0xf]
  %v1393 = vld [vmem:[#allocation2 + $0xc] sm:$0xf]
  %v1394 = vld [vmem:[#allocation2 + $0x10] sm:$0xf]
  %v1395 = vld [vmem:[#allocation2 + $0x14] sm:$0xf]
  %v1396 = vld [vmem:[#allocation2 + $0x18] sm:$0xf]
  %v1397 = vld [vmem:[#allocation2 + $0x1c] sm:$0xf]
  %v1398 = vld [vmem:[#allocation2 + $0x20] sm:$0xf]
  %v1399 = vld [vmem:[#allocation2 + $0x24] sm:$0xf]
  %v1400 = vld [vmem:[#allocation2 + $0x28] sm:$0xf]
  %v1401 = vld [vmem:[#allocation2 + $0x2c] sm:$0xf]
  %v1402 = vld [vmem:[#allocation2 + $0x30] sm:$0xf]
  %v1403 = vld [vmem:[#allocation2 + $0x34] sm:$0xf]
  %v1404 = vld [vmem:[#allocation2 + $0x38] sm:$0xf]
  %v1405 = vld [vmem:[#allocation2 + $0x3c] sm:$0xf]
  %v1406 = vld [vmem:[#allocation2 + $0x40] sm:$0xf]
  %v1407 = vld [vmem:[#allocation2 + $0x44] sm:$0xf]
  %v1408 = vld [vmem:[#allocation2 + $0x48] sm:$0xf]
  %v1409 = vld [vmem:[#allocation2 + $0x4c] sm:$0xf]
  %v1410 = vld [vmem:[#allocation2 + $0x50] sm:$0xf]
  %v1411 = vld [vmem:[#allocation2 + $0x54] sm:$0xf]
  %v1412 = vld [vmem:[#allocation2 + $0x58] sm:$0xf]
  %v1413 = vld [vmem:[#allocation2 + $0x5c] sm:$0xf]
  %v1414 = vld [vmem:[#allocation2 + $0x60] sm:$0xf]
  %v1415 = vld [vmem:[#allocation2 + $0x64] sm:$0xf]
  %v1416 = vld [vmem:[#allocation2 + $0x68] sm:$0xf]
  %v1417 = vld [vmem:[#allocation2 + $0x6c] sm:$0xf]
  %v1446 = vunpack.c.l.b16 %v1390
  %v1447 = vunpack.c.l.b16 %v1391
  %v1448 = vunpack.c.l.b16 %v1392
  %v1449 = vunpack.c.l.b16 %v1393
  %v1450 = vunpack.c.l.b16 %v1394
  %v1451 = vunpack.c.l.b16 %v1395
  %v1452 = vunpack.c.l.b16 %v1396
  %v1453 = vunpack.c.l.b16 %v1397
  %v1454 = vunpack.c.l.b16 %v1398
  %v1455 = vunpack.c.l.b16 %v1399
  %v1456 = vunpack.c.l.b16 %v1400
  %v1457 = vunpack.c.l.b16 %v1401
  %v1458 = vunpack.c.l.b16 %v1402
  %v1459 = vunpack.c.l.b16 %v1403
  %v1460 = vunpack.c.l.b16 %v1404
  %v1461 = vunpack.c.l.b16 %v1405
  %v1462 = vunpack.c.l.b16 %v1406
  %v1463 = vunpack.c.l.b16 %v1407
  %v1464 = vunpack.c.l.b16 %v1408
  %v1465 = vunpack.c.l.b16 %v1409
  %v1466 = vunpack.c.l.b16 %v1410
  %v1467 = vunpack.c.l.b16 %v1411
  %v1468 = vunpack.c.l.b16 %v1412
  %v1469 = vunpack.c.l.b16 %v1413
  %v1470 = vunpack.c.l.b16 %v1414
  %v1471 = vunpack.c.l.b16 %v1415
  %v1472 = vunpack.c.l.b16 %v1416
  %v1473 = vunpack.c.l.b16 %v1417
  %v1474 = vpack.c.b16 %v1447, %v1446
  %v1475 = vpack.c.b16 %v1449, %v1448
  %v1476 = vpack.c.b16 %v1451, %v1450
  %v1477 = vpack.c.b16 %v1453, %v1452
  %v1478 = vpack.c.b16 %v1455, %v1454
  %v1479 = vpack.c.b16 %v1457, %v1456
  %v1480 = vpack.c.b16 %v1459, %v1458
  %v1481 = vpack.c.b16 %v1461, %v1460
  %v1482 = vpack.c.b16 %v1463, %v1462
  %v1483 = vpack.c.b16 %v1465, %v1464
  %v1484 = vpack.c.b16 %v1467, %v1466
  %v1485 = vpack.c.b16 %v1469, %v1468
  %v1486 = vpack.c.b16 %v1471, %v1470
  %v1487 = vpack.c.b16 %v1473, %v1472
  %1502 = vmatpush.bf16.msra.mxu0 %v1481
  %1503 = vmatpush.bf16.msra.mxu0 %v1480
  %1504 = vmatpush.bf16.msra.mxu0 %v1479
  %1505 = vmatpush.bf16.msra.mxu0 %v1478
  %1506 = vmatpush.bf16.msra.mxu0 %v1477
  %1507 = vmatpush.bf16.msra.mxu0 %v1476
  %1508 = vmatpush.bf16.msra.mxu0 %v1475
  %1509 = vmatpush.bf16.msra.mxu0 %v1474
  %1510 = vmatmul.bf16.gmra.mxu0 %v715
  %v1511 = vpop.f32.mrf.mxu0
  %v1512 = vadd.f32 0.0, %v1511
  %v1513 = vpop.f32.mrf.mxu0
  %v1514 = vadd.f32 0.0, %v1513
  %1515 = vmatmul.bf16.gmra.mxu0 %v717
  %v1516 = vpop.f32.mrf.mxu0
  %v1517 = vadd.f32 0.0, %v1516
  %v1518 = vpop.f32.mrf.mxu0
  %v1519 = vadd.f32 0.0, %v1518
  %1520 = vmatmul.bf16.gmra.mxu0 %v719
  %v1521 = vpop.f32.mrf.mxu0
  %v1522 = vadd.f32 0.0, %v1521
  %v1523 = vpop.f32.mrf.mxu0
  %v1524 = vadd.f32 0.0, %v1523
  %1525 = vmatmul.bf16.gmra.mxu0 %v721
  %v1526 = vpop.f32.mrf.mxu0
  %v1527 = vadd.f32 0.0, %v1526
  %v1528 = vpop.f32.mrf.mxu0
  %v1529 = vadd.f32 0.0, %v1528
  %1530 = vmatmul.bf16.gmra.mxu0 %v723
  %v1531 = vpop.f32.mrf.mxu0
  %v1532 = vadd.f32 0.0, %v1531
  %v1533 = vpop.f32.mrf.mxu0
  %v1534 = vadd.f32 0.0, %v1533
  %1535 = vmatmul.bf16.gmra.mxu0 %v725
  %v1536 = vpop.f32.mrf.mxu0
  %v1537 = vadd.f32 0.0, %v1536
  %v1538 = vpop.f32.mrf.mxu0
  %v1539 = vadd.f32 0.0, %v1538
  %1540 = vmatmul.bf16.gmra.mxu0 %v727
  %v1541 = vpop.f32.mrf.mxu0
  %v1542 = vadd.f32 0.0, %v1541
  %v1543 = vpop.f32.mrf.mxu0
  %v1544 = vadd.f32 0.0, %v1543
  %1545 = vmatmul.bf16.gmra.mxu0 %v729
  %v1546 = vpop.f32.mrf.mxu0
  %v1547 = vadd.f32 0.0, %v1546
  %v1548 = vpop.f32.mrf.mxu0
  %v1549 = vadd.f32 0.0, %v1548
  %1550 = vmatmul.bf16.gmra.mxu0 %v731
  %v1551 = vpop.f32.mrf.mxu0
  %v1552 = vadd.f32 0.0, %v1551
  %v1553 = vpop.f32.mrf.mxu0
  %v1554 = vadd.f32 0.0, %v1553
  %1555 = vmatmul.bf16.gmra.mxu0 %v733
  %v1556 = vpop.f32.mrf.mxu0
  %v1557 = vadd.f32 0.0, %v1556
  %v1558 = vpop.f32.mrf.mxu0
  %v1559 = vadd.f32 0.0, %v1558
  %1560 = vmatmul.bf16.gmra.mxu0 %v735
  %v1561 = vpop.f32.mrf.mxu0
  %v1562 = vadd.f32 0.0, %v1561
  %v1563 = vpop.f32.mrf.mxu0
  %v1564 = vadd.f32 0.0, %v1563
  %1565 = vmatmul.bf16.gmra.mxu0 %v737
  %v1566 = vpop.f32.mrf.mxu0
  %v1567 = vadd.f32 0.0, %v1566
  %v1568 = vpop.f32.mrf.mxu0
  %v1569 = vadd.f32 0.0, %v1568
  %1570 = vmatmul.bf16.gmra.mxu0 %v739
  %v1571 = vpop.f32.mrf.mxu0
  %v1572 = vadd.f32 0.0, %v1571
  %v1573 = vpop.f32.mrf.mxu0
  %1574 = vdwg.mxu0
  %1575 = vmatpush.bf16.msra.mxu0 0
  %1576 = vmatpush.bf16.msra.mxu0 0
  %1577 = vmatpush.bf16.msra.mxu0 %v1487
  %1578 = vmatpush.bf16.msra.mxu0 %v1486
  %1579 = vmatpush.bf16.msra.mxu0 %v1485
  %1580 = vmatpush.bf16.msra.mxu0 %v1484
  %1581 = vmatpush.bf16.msra.mxu0 %v1483
  %1582 = vmatpush.bf16.msra.mxu0 %v1482
  %1583 = vmatmul.bf16.gmra.mxu0 %v840
  %v1584 = vpop.f32.mrf.mxu0
  %v1585 = vadd.f32 %v1512, %v1584
  %v1586 = vpop.f32.mrf.mxu0
  %v1587 = vadd.f32 %v1514, %v1586
  %1588 = vmatmul.bf16.gmra.mxu0 %v843
  %v1589 = vpop.f32.mrf.mxu0
  %v1590 = vadd.f32 %v1517, %v1589
  %v1591 = vpop.f32.mrf.mxu0
  %v1592 = vadd.f32 %v1519, %v1591
  %1593 = vmatmul.bf16.gmra.mxu0 %v846
  %v1594 = vpop.f32.mrf.mxu0
  %v1595 = vadd.f32 %v1522, %v1594
  %v1596 = vpop.f32.mrf.mxu0
  %v1597 = vadd.f32 %v1524, %v1596
  %1598 = vmatmul.bf16.gmra.mxu0 %v849
  %v1599 = vpop.f32.mrf.mxu0
  %v1600 = vadd.f32 %v1527, %v1599
  %v1601 = vpop.f32.mrf.mxu0
  %v1602 = vadd.f32 %v1529, %v1601
  %1603 = vmatmul.bf16.gmra.mxu0 %v852
  %v1604 = vpop.f32.mrf.mxu0
  %v1605 = vadd.f32 %v1532, %v1604
  %v1606 = vpop.f32.mrf.mxu0
  %v1607 = vadd.f32 %v1534, %v1606
  %1608 = vmatmul.bf16.gmra.mxu0 %v855
  %v1609 = vpop.f32.mrf.mxu0
  %v1610 = vadd.f32 %v1537, %v1609
  %v1611 = vpop.f32.mrf.mxu0
  %v1612 = vadd.f32 %v1539, %v1611
  %1613 = vmatmul.bf16.gmra.mxu0 %v858
  %v1614 = vpop.f32.mrf.mxu0
  %v1615 = vadd.f32 %v1542, %v1614
  %v1616 = vpop.f32.mrf.mxu0
  %v1617 = vadd.f32 %v1544, %v1616
  %1618 = vmatmul.bf16.gmra.mxu0 %v861
  %v1619 = vpop.f32.mrf.mxu0
  %v1620 = vadd.f32 %v1547, %v1619
  %v1621 = vpop.f32.mrf.mxu0
  %v1622 = vadd.f32 %v1549, %v1621
  %1623 = vmatmul.bf16.gmra.mxu0 %v864
  %v1624 = vpop.f32.mrf.mxu0
  %v1625 = vadd.f32 %v1552, %v1624
  %v1626 = vpop.f32.mrf.mxu0
  %v1627 = vadd.f32 %v1554, %v1626
  %1628 = vmatmul.bf16.gmra.mxu0 %v867
  %v1629 = vpop.f32.mrf.mxu0
  %v1630 = vadd.f32 %v1557, %v1629
  %v1631 = vpop.f32.mrf.mxu0
  %v1632 = vadd.f32 %v1559, %v1631
  %1633 = vmatmul.bf16.gmra.mxu0 %v870
  %v1634 = vpop.f32.mrf.mxu0
  %v1635 = vadd.f32 %v1562, %v1634
  %v1636 = vpop.f32.mrf.mxu0
  %v1637 = vadd.f32 %v1564, %v1636
  %1638 = vmatmul.bf16.gmra.mxu0 %v873
  %v1639 = vpop.f32.mrf.mxu0
  %v1640 = vadd.f32 %v1567, %v1639
  %v1641 = vpop.f32.mrf.mxu0
  %v1642 = vadd.f32 %v1569, %v1641
  %1643 = vmatmul.bf16.gmra.mxu0 %v876
  %v1644 = vpop.f32.mrf.mxu0
  %v1645 = vadd.f32 %v1572, %v1644
  %v1646 = vpop.f32.mrf.mxu0
  %1647 = vdwg.mxu0
  %s1648 = scalar_lea.vmem %s5, 200
  %1649 = vst.msk [vmem:[%s1648] sm:$0xff] %vm1024, %v1585
  %1650 = vst.msk [vmem:[%s1648 + $0x8] sm:$0xff] %vm1024, %v1587
  %1651 = vst.msk [vmem:[%s1648 + $0x10] sm:$0xff] %vm1024, %v1590
  %1652 = vst.msk [vmem:[%s1648 + $0x18] sm:$0xff] %vm1024, %v1592
  %1653 = vst.msk [vmem:[%s1648 + $0x20] sm:$0xff] %vm1024, %v1595
  %1654 = vst.msk [vmem:[%s1648 + $0x28] sm:$0xff] %vm1024, %v1597
  %1655 = vst.msk [vmem:[%s1648 + $0x30] sm:$0xff] %vm1024, %v1600
  %1656 = vst.msk [vmem:[%s1648 + $0x38] sm:$0xff] %vm1024, %v1602
  %1657 = vst.msk [vmem:[%s1648 + $0x40] sm:$0xff] %vm1024, %v1605
  %1658 = vst.msk [vmem:[%s1648 + $0x48] sm:$0xff] %vm1024, %v1607
  %1659 = vst.msk [vmem:[%s1648 + $0x50] sm:$0xff] %vm1024, %v1610
  %1660 = vst.msk [vmem:[%s1648 + $0x58] sm:$0xff] %vm1024, %v1612
  %1661 = vst.msk [vmem:[%s1648 + $0x60] sm:$0xff] %vm1024, %v1615
  %1662 = vst.msk [vmem:[%s1648 + $0x68] sm:$0xff] %vm1024, %v1617
  %1663 = vst.msk [vmem:[%s1648 + $0x70] sm:$0xff] %vm1024, %v1620
  %1664 = vst.msk [vmem:[%s1648 + $0x78] sm:$0xff] %vm1024, %v1622
  %1665 = vst.msk [vmem:[%s1648 + $0x80] sm:$0xff] %vm1024, %v1625
  %1666 = vst.msk [vmem:[%s1648 + $0x88] sm:$0xff] %vm1024, %v1627
  %1667 = vst.msk [vmem:[%s1648 + $0x90] sm:$0xff] %vm1024, %v1630
  %1668 = vst.msk [vmem:[%s1648 + $0x98] sm:$0xff] %vm1024, %v1632
  %1669 = vst.msk [vmem:[%s1648 + $0xa0] sm:$0xff] %vm1024, %v1635
  %1670 = vst.msk [vmem:[%s1648 + $0xa8] sm:$0xff] %vm1024, %v1637
  %1671 = vst.msk [vmem:[%s1648 + $0xb0] sm:$0xff] %vm1024, %v1640
  %1672 = vst.msk [vmem:[%s1648 + $0xb8] sm:$0xff] %vm1024, %v1642
  %1673 = vst.msk [vmem:[%s1648 + $0xc0] sm:$0xf] %vm527, %v1645
  // Predicated region
  $region22: #{tpu_custom_call.1} parent=0 // pred_check
    _
  $region23: #{tpu_custom_call.1} parent=0 // pred_check_branch
    %1675 = sbr.rel (0) target = $region25
  $region24: #{tpu_custom_call.1} parent=0 // pred_region
    _
  $region25: #{tpu_custom_call.1} parent=0 // pred_fallthru
    _
  // Predicated region
  $region26: #{tpu_custom_call.1} parent=0 // pred_check
    _
  $region27: #{tpu_custom_call.1} parent=0 // pred_check_branch
    %1677 = sbr.rel (0) target = $region29
  $region28: #{tpu_custom_call.1} parent=0 // pred_region
    _
  $region29: #{tpu_custom_call.1} parent=0 // pred_fallthru
    _

</llo_original>
